<compile_context>
chip_gen: v7x
topology: tpu7x:2x2x1
jax: 0.10.0
libtpu: 0.0.40
codegen_flags: <defaults>
</compile_context>

<pallas_src>
import math
import jax
import jax.numpy as jnp
from jax.experimental import pallas as pl
from jax.experimental.pallas import tpu as pltpu

_INV_SQRT2 = 0.7071067811865476        # 1/sqrt(2) -- exact-GELU constant
_SQRT_2_OVER_PI = 0.7978845608028654   # sqrt(2/pi) -- tanh-GELU constant


def _gelu_exact(h):
    # exact GELU: 0.5 * x * (1 + erf(x / sqrt(2))) -- matches nn.GELU() default
    return 0.5 * h * (1.0 + jax.lax.erf(h * _INV_SQRT2))


def _gelu_tanh(h):
    # tanh approximation -- goes to the EUP instead of the VALU erf polynomial
    return 0.5 * h * (1.0 + jnp.tanh(_SQRT_2_OVER_PI * (h + 0.044715 * h * h * h)))


def _round_up(n, m):
    return ((n + m - 1) // m) * m


def _num_tensorcores():
    """2 on v7x-class parts (2 TCs/chip), else 1. Perf-only heuristic."""
    try:
        kind = jax.devices()[0].device_kind.lower()
    except Exception:
        return 1
    return 2 if ("v7" in kind or "7x" in kind) else 1


def make_denoiser_kernel(num_linear_layers, s_dim, *, approximate_gelu, precision):
    """Kernel ref order: (x, sigma, Wx0, Ws0, b0, W1, b1, ..., out).

    The first Linear is computed as an x-part MXU matmul plus s_dim VPU
    broadcast FMAs for the sigma part, so the wrapper never materializes the
    concatenated input and the K=2 contraction never touches the MXU.
    GELU after every Linear except the last.
    """
    assert num_linear_layers >= 2
    gelu = _gelu_tanh if approximate_gelu else _gelu_exact

    def kernel(*refs):
        x_ref, s_ref = refs[0], refs[1]
        out_ref = refs[-1]
        p = refs[2:-1]
        assert len(p) == 3 + 2 * (num_linear_layers - 1)

        # ----- Layer 0: x-part on the MXU ---------------------------------
        # (.astype is a no-op for f32 params; upcasts bf16-stored weights.)
        wx = p[0][...].astype(jnp.float32)
        h = jnp.dot(x_ref[...], wx,
                    preferred_element_type=jnp.float32, precision=precision)

        # ----- Layer 0: sigma part as VPU broadcast FMAs (K = s_dim = 2) --
        s = s_ref[...]
        ws = p[1][...].astype(jnp.float32)          # (s_dim, hidden0)
        for j in range(s_dim):                      # unrolled at trace time
            h = h + s[:, j:j + 1] * ws[j:j + 1, :]

        h = gelu(h + p[2][...].astype(jnp.float32))

        # ----- Remaining layers -------------------------------------------
        rest = p[3:]
        n_rest = num_linear_layers - 1
        for i in range(n_rest):
            w = rest[2 * i][...].astype(jnp.float32)       # (in, out)
            b = rest[2 * i + 1][...].astype(jnp.float32)   # (1, out)
            h = jnp.dot(h, w, preferred_element_type=jnp.float32,
                        precision=precision) + b
            if i < n_rest - 1:
                h = gelu(h)

        out_ref[...] = h.astype(out_ref.dtype)

    return kernel


def init_denoiser_params(key, dim, hidden_dims):
    """Deterministic init mimicking PyTorch Linear defaults (U(-1/sqrt(fan_in), +))."""
    dims = (dim + 2,) + tuple(hidden_dims) + (dim,)
    params = []
    for in_dim, out_dim in zip(dims[:-1], dims[1:]):
        key, kw, kb = jax.random.split(key, 3)
        bound = 1.0 / math.sqrt(in_dim)
        w = jax.random.uniform(kw, (in_dim, out_dim), jnp.float32, -bound, bound)
        b = jax.random.uniform(kb, (1, out_dim), jnp.float32, -bound, bound)
        params.append((w, b))
    return params


def denoiser_forward(x, sigma_embeds, params, *, tm=2048,
                     approximate_gelu=False,
                     precision=jax.lax.Precision.HIGHEST,
                     deep_buffer=True):
    """x: (B, dim) f32, sigma_embeds: (B, 2) f32  ->  (B, dim) f32.

    Weights may be f32 or bf16 (bf16 halves weight DMA/VMEM; accumulation is f32).
    """
    B, dim = x.shape
    s_dim = sigma_embeds.shape[1]
    num_linear = len(params)

    # Split the first layer's weight at trace time (no runtime concat needed).
    w0, b0 = params[0]
    flat = [w0[:dim, :], w0[dim:, :], b0]
    for w, b in params[1:]:
        flat += [w, b]

    # --- Batch tiling -------------------------------------------------------
    # Large default tile to amortize ~0.35us/step; capped so 2-TC parts (v7x)
    # still get >= 2 grid steps to shard across cores.
    tm_eff = min(_round_up(B, 8), tm)
    n_tc = _num_tensorcores()
    if n_tc > 1:
        per_core = _round_up((B + n_tc - 1) // n_tc, 8)
        if tm_eff > per_core:
            tm_eff = per_core
    b_pad = _round_up(B, tm_eff)
    if b_pad != B:
        x_in = jnp.pad(x, ((0, b_pad - B), (0, 0)))
        s_in = jnp.pad(sigma_embeds, ((0, b_pad - B), (0, 0)))
    else:
        x_in, s_in = x, sigma_embeds
    nb = b_pad // tm_eff

    kernel = make_denoiser_kernel(num_linear, s_dim,
                                  approximate_gelu=approximate_gelu,
                                  precision=precision)

    # Deeper buffering on the streamed activation tiles only (weights are
    # already VMEM-resident via the constant index_map).
    use_buf3 = deep_buffer and nb >= 3
    act_kwargs = dict(pipeline_mode=pl.Buffered(3)) if use_buf3 else {}

    in_specs = [
        pl.BlockSpec((tm_eff, dim), lambda i: (i, 0), **act_kwargs),
        pl.BlockSpec((tm_eff, s_dim), lambda i: (i, 0), **act_kwargs),
    ]
    # Weights/biases: full arrays, constant index_map -> VMEM-resident across grid.
    for p_arr in flat:
        in_specs.append(pl.BlockSpec(p_arr.shape, lambda i: (0, 0)))
    out_spec = pl.BlockSpec((tm_eff, dim), lambda i: (i, 0))

    # --- Compiler params / VMEM guard (relevant only for very large tm on v5e)
    widths = [w.shape[1] for (w, _) in params]          # [h0, ..., dim]
    buf_depth = 3 if use_buf3 else 2
    vmem_est = (buf_depth * tm_eff * (dim + s_dim) * 4          # x, sigma buffers
                + 2 * tm_eff * dim * 4                          # out buffers
                + 2 * sum(int(p.size) * p.dtype.itemsize for p in flat)
                + 4 * tm_eff * max(widths) * 4)                 # live intermediates
    compiler_kwargs = dict(dimension_semantics=("parallel",))
    if vmem_est > (12 << 20):
        compiler_kwargs["vmem_limit_bytes"] = min(2 * vmem_est, 64 << 20)

    # Advisory cost estimate for the XLA scheduler.
    in_dims = [dim + s_dim] + widths[:-1]
    flops = 2 * B * sum(a * b for a, b in zip(in_dims, widths))
    transcendentals = B * sum(widths[:-1])             # one GELU per hidden unit
    bytes_accessed = (4 * (x.size + sigma_embeds.size + B * dim)
                      + sum(int(p.size) * p.dtype.itemsize for p in flat))
    cost = pl.CostEstimate(flops=flops, transcendentals=transcendentals,
                           bytes_accessed=bytes_accessed)

    out = pl.pallas_call(
        kernel,
        out_shape=jax.ShapeDtypeStruct((b_pad, dim), x.dtype),
        grid=(nb,),
        in_specs=in_specs,
        out_specs=out_spec,
        compiler_params=pltpu.CompilerParams(**compiler_kwargs),
        cost_estimate=cost,
    )(x_in, s_in, *flat)

    if b_pad != B:
        out = out[:B]
    return out


def denoiser_reference(x, sigma_embeds, params, *, approximate=False):
    """Pure-JAX reference (torch.cat + Linear/GELU stack) for correctness checks."""
    gelu = _gelu_tanh if approximate else _gelu_exact
    h = jnp.concatenate([x, sigma_embeds], axis=1)
    n = len(params)
    for i, (w, b) in enumerate(params):
        h = jnp.dot(h, w.astype(jnp.float32),
                    precision=jax.lax.Precision.HIGHEST) + b.astype(jnp.float32)
        if i < n - 1:
            h = gelu(h)
    return h


if __name__ == "__main__":
    # Small shapes consistent with the module: dim=16, hidden_dims=(32, 32).
    dim = 16
    hidden_dims = (32, 32)

    key = jax.random.PRNGKey(0)
    key, kx, ks, kp = jax.random.split(key, 4)
    params = init_denoiser_params(kp, dim, hidden_dims)

    fwd = jax.jit(denoiser_forward,
                  static_argnames=("tm", "approximate_gelu", "precision", "deep_buffer"))

    # Case 1: batch=8, defaults (exact erf GELU, f32 weights, HIGHEST precision),
    # single block grid.
    x = jax.random.normal(kx, (8, dim), jnp.float32)
    s = jax.random.normal(ks, (8, 2), jnp.float32)
    out = jax.block_until_ready(fwd(x, s, params))
    ref = denoiser_reference(x, s, params)
    assert out.shape == (8, dim)
    assert jnp.allclose(out, ref, atol=1e-5, rtol=1e-5), "mismatch vs reference (B=8)"

    # Case 2: batch=40 with tm=16 to exercise the padded parallel batch grid
    # (grid>=3 -> Buffered(3) activation pipeline), bf16-stored weights
    # (halved weight DMA/VMEM) and the tanh-approximate (EUP) GELU fast path.
    key, kx2, ks2 = jax.random.split(key, 3)
    x2 = jax.random.normal(kx2, (40, dim), jnp.float32)
    s2 = jax.random.normal(ks2, (40, 2), jnp.float32)
    params_bf16 = [(w.astype(jnp.bfloat16), b) for (w, b) in params]
    out2 = jax.block_until_ready(fwd(x2, s2, params_bf16, tm=16, approximate_gelu=True))
    ref2 = denoiser_reference(
        x2, s2, [(w.astype(jnp.float32), b) for (w, b) in params_bf16], approximate=True)
    assert out2.shape == (40, dim)
    assert jnp.allclose(out2, ref2, atol=5e-3, rtol=5e-3), "mismatch vs reference (B=40)"

    print("KERNEL_OK")
</pallas_src>

<mosaic_0001>
module attributes {stable_mosaic.version = 11 : i64} {
  func.func @kernel(%arg0: i32, %arg1: memref<8x16xf32, #tpu.memory_space<vmem>>, %arg2: memref<8x2xf32, #tpu.memory_space<vmem>>, %arg3: memref<16x32xf32, #tpu.memory_space<vmem>>, %arg4: memref<2x32xf32, #tpu.memory_space<vmem>>, %arg5: memref<1x32xf32, #tpu.memory_space<vmem>>, %arg6: memref<32x32xf32, #tpu.memory_space<vmem>>, %arg7: memref<1x32xf32, #tpu.memory_space<vmem>>, %arg8: memref<32x16xf32, #tpu.memory_space<vmem>>, %arg9: memref<1x16xf32, #tpu.memory_space<vmem>>, %arg10: memref<8x16xf32, #tpu.memory_space<vmem>>) attributes {dimension_semantics = [#tpu.dimension_semantics<parallel>], iteration_bounds = array<i64: 1>, scalar_prefetch = 0 : i64, scratch_operands = 0 : i64, tpu.core_type = #tpu.core_type<tc>, window_params = [{transform_indices = @transform_0, window_bounds = array<i64: 8, 16>}, {transform_indices = @transform_1, window_bounds = array<i64: 8, 2>}, {pipeline_mode = #tpu.pipeline_mode<synchronous>, transform_indices = @transform_2, window_bounds = array<i64: 16, 32>}, {pipeline_mode = #tpu.pipeline_mode<synchronous>, transform_indices = @transform_3, window_bounds = array<i64: 2, 32>}, {pipeline_mode = #tpu.pipeline_mode<synchronous>, transform_indices = @transform_4, window_bounds = array<i64: 1, 32>}, {pipeline_mode = #tpu.pipeline_mode<synchronous>, transform_indices = @transform_5, window_bounds = array<i64: 32, 32>}, {pipeline_mode = #tpu.pipeline_mode<synchronous>, transform_indices = @transform_6, window_bounds = array<i64: 1, 32>}, {pipeline_mode = #tpu.pipeline_mode<synchronous>, transform_indices = @transform_7, window_bounds = array<i64: 32, 16>}, {pipeline_mode = #tpu.pipeline_mode<synchronous>, transform_indices = @transform_8, window_bounds = array<i64: 1, 16>}, {transform_indices = @transform_9, window_bounds = array<i64: 8, 16>}]} {
    %c0 = arith.constant 0 : index
    %c0_0 = arith.constant 0 : index
    %0 = vector.load %arg3[%c0, %c0_0] : memref<16x32xf32, #tpu.memory_space<vmem>>, vector<16x32xf32>
    %c0_1 = arith.constant 0 : index
    %c0_2 = arith.constant 0 : index
    %1 = vector.load %arg1[%c0_1, %c0_2] : memref<8x16xf32, #tpu.memory_space<vmem>>, vector<8x16xf32>
    %cst = arith.constant dense<0.000000e+00> : vector<8x32xf32>
    %2 = tpu.matmul %1, %0, %cst {dimension_numbers = #tpu.dot_dimension_numbers<[1], [0], [0], [1], [0, 0, 1, 1], [], []>, precision = #tpu.contract_precision<fp32>} : vector<8x16xf32>, vector<16x32xf32>, vector<8x32xf32> -> vector<8x32xf32>
    %c0_3 = arith.constant 0 : index
    %c0_4 = arith.constant 0 : index
    %3 = vector.load %arg2[%c0_3, %c0_4] : memref<8x2xf32, #tpu.memory_space<vmem>>, vector<8x2xf32>
    %c0_5 = arith.constant 0 : index
    %c0_6 = arith.constant 0 : index
    %4 = vector.load %arg4[%c0_5, %c0_6] : memref<2x32xf32, #tpu.memory_space<vmem>>, vector<2x32xf32>
    %5 = vector.extract_strided_slice %3 {offsets = [0, 0], sizes = [8, 1], strides = [1, 1]} : vector<8x2xf32> to vector<8x1xf32>
    %6 = vector.extract_strided_slice %4 {offsets = [0, 0], sizes = [1, 32], strides = [1, 1]} : vector<2x32xf32> to vector<1x32xf32>
    %7 = vector.broadcast %5 : vector<8x1xf32> to vector<8x32xf32>
    %8 = vector.broadcast %6 : vector<1x32xf32> to vector<8x32xf32>
    %9 = arith.mulf %7, %8 : vector<8x32xf32>
    %10 = arith.addf %2, %9 : vector<8x32xf32>
    %11 = vector.extract_strided_slice %3 {offsets = [0, 1], sizes = [8, 1], strides = [1, 1]} : vector<8x2xf32> to vector<8x1xf32>
    %12 = vector.extract_strided_slice %4 {offsets = [1, 0], sizes = [1, 32], strides = [1, 1]} : vector<2x32xf32> to vector<1x32xf32>
    %13 = vector.broadcast %11 : vector<8x1xf32> to vector<8x32xf32>
    %14 = vector.broadcast %12 : vector<1x32xf32> to vector<8x32xf32>
    %15 = arith.mulf %13, %14 : vector<8x32xf32>
    %16 = arith.addf %10, %15 : vector<8x32xf32>
    %c0_7 = arith.constant 0 : index
    %c0_8 = arith.constant 0 : index
    %17 = vector.load %arg5[%c0_7, %c0_8] : memref<1x32xf32, #tpu.memory_space<vmem>>, vector<1x32xf32>
    %18 = vector.broadcast %17 : vector<1x32xf32> to vector<8x32xf32>
    %19 = arith.addf %16, %18 : vector<8x32xf32>
    %cst_9 = arith.constant 5.000000e-01 : f32
    %20 = vector.broadcast %cst_9 : f32 to vector<8x32xf32>
    %21 = arith.mulf %20, %19 : vector<8x32xf32>
    %cst_10 = arith.constant 0.707106769 : f32
    %22 = vector.broadcast %cst_10 : f32 to vector<8x32xf32>
    %23 = arith.mulf %19, %22 : vector<8x32xf32>
    %24 = math.erf %23 : vector<8x32xf32>
    %cst_11 = arith.constant 1.000000e+00 : f32
    %25 = vector.broadcast %cst_11 : f32 to vector<8x32xf32>
    %26 = arith.addf %25, %24 : vector<8x32xf32>
    %27 = arith.mulf %21, %26 : vector<8x32xf32>
    %c0_12 = arith.constant 0 : index
    %c0_13 = arith.constant 0 : index
    %28 = vector.load %arg6[%c0_12, %c0_13] : memref<32x32xf32, #tpu.memory_space<vmem>>, vector<32x32xf32>
    %c0_14 = arith.constant 0 : index
    %c0_15 = arith.constant 0 : index
    %29 = vector.load %arg7[%c0_14, %c0_15] : memref<1x32xf32, #tpu.memory_space<vmem>>, vector<1x32xf32>
    %cst_16 = arith.constant dense<0.000000e+00> : vector<8x32xf32>
    %30 = tpu.matmul %27, %28, %cst_16 {dimension_numbers = #tpu.dot_dimension_numbers<[1], [0], [0], [1], [0, 0, 1, 1], [], []>, precision = #tpu.contract_precision<fp32>} : vector<8x32xf32>, vector<32x32xf32>, vector<8x32xf32> -> vector<8x32xf32>
    %31 = vector.broadcast %29 : vector<1x32xf32> to vector<8x32xf32>
    %32 = arith.addf %30, %31 : vector<8x32xf32>
    %cst_17 = arith.constant 5.000000e-01 : f32
    %33 = vector.broadcast %cst_17 : f32 to vector<8x32xf32>
    %34 = arith.mulf %33, %32 : vector<8x32xf32>
    %cst_18 = arith.constant 0.707106769 : f32
    %35 = vector.broadcast %cst_18 : f32 to vector<8x32xf32>
    %36 = arith.mulf %32, %35 : vector<8x32xf32>
    %37 = math.erf %36 : vector<8x32xf32>
    %cst_19 = arith.constant 1.000000e+00 : f32
    %38 = vector.broadcast %cst_19 : f32 to vector<8x32xf32>
    %39 = arith.addf %38, %37 : vector<8x32xf32>
    %40 = arith.mulf %34, %39 : vector<8x32xf32>
    %c0_20 = arith.constant 0 : index
    %c0_21 = arith.constant 0 : index
    %41 = vector.load %arg8[%c0_20, %c0_21] : memref<32x16xf32, #tpu.memory_space<vmem>>, vector<32x16xf32>
    %c0_22 = arith.constant 0 : index
    %c0_23 = arith.constant 0 : index
    %42 = vector.load %arg9[%c0_22, %c0_23] : memref<1x16xf32, #tpu.memory_space<vmem>>, vector<1x16xf32>
    %cst_24 = arith.constant dense<0.000000e+00> : vector<8x16xf32>
    %43 = tpu.matmul %40, %41, %cst_24 {dimension_numbers = #tpu.dot_dimension_numbers<[1], [0], [0], [1], [0, 0, 1, 1], [], []>, precision = #tpu.contract_precision<fp32>} : vector<8x32xf32>, vector<32x16xf32>, vector<8x16xf32> -> vector<8x16xf32>
    %44 = vector.broadcast %42 : vector<1x16xf32> to vector<8x16xf32>
    %45 = arith.addf %43, %44 : vector<8x16xf32>
    %c0_25 = arith.constant 0 : index
    %c0_26 = arith.constant 0 : index
    %46 = vector.load %arg10[%c0_25, %c0_26] : memref<8x16xf32, #tpu.memory_space<vmem>>, vector<8x16xf32>
    tpu.vector_store %arg10[%c0_25, %c0_26], %45 {strides = array<i32>} : memref<8x16xf32, #tpu.memory_space<vmem>>, vector<8x16xf32>,
    return
  }
  func.func @transform_0(%arg0: i32) -> (i32, i32) {
    %c0_i32 = arith.constant 0 : i32
    %c0_i32_0 = arith.constant 0 : i32
    return %arg0, %c0_i32 : i32, i32
  }
  func.func @transform_1(%arg0: i32) -> (i32, i32) {
    %c0_i32 = arith.constant 0 : i32
    %c0_i32_0 = arith.constant 0 : i32
    return %arg0, %c0_i32 : i32, i32
  }
  func.func @transform_2(%arg0: i32) -> (i32, i32) {
    %c0_i32 = arith.constant 0 : i32
    %c0_i32_0 = arith.constant 0 : i32
    %c0_i32_1 = arith.constant 0 : i32
    return %c0_i32, %c0_i32_0 : i32, i32
  }
  func.func @transform_3(%arg0: i32) -> (i32, i32) {
    %c0_i32 = arith.constant 0 : i32
    %c0_i32_0 = arith.constant 0 : i32
    %c0_i32_1 = arith.constant 0 : i32
    return %c0_i32, %c0_i32_0 : i32, i32
  }
  func.func @transform_4(%arg0: i32) -> (i32, i32) {
    %c0_i32 = arith.constant 0 : i32
    %c0_i32_0 = arith.constant 0 : i32
    %c0_i32_1 = arith.constant 0 : i32
    return %c0_i32, %c0_i32_0 : i32, i32
  }
  func.func @transform_5(%arg0: i32) -> (i32, i32) {
    %c0_i32 = arith.constant 0 : i32
    %c0_i32_0 = arith.constant 0 : i32
    %c0_i32_1 = arith.constant 0 : i32
    return %c0_i32, %c0_i32_0 : i32, i32
  }
  func.func @transform_6(%arg0: i32) -> (i32, i32) {
    %c0_i32 = arith.constant 0 : i32
    %c0_i32_0 = arith.constant 0 : i32
    %c0_i32_1 = arith.constant 0 : i32
    return %c0_i32, %c0_i32_0 : i32, i32
  }
  func.func @transform_7(%arg0: i32) -> (i32, i32) {
    %c0_i32 = arith.constant 0 : i32
    %c0_i32_0 = arith.constant 0 : i32
    %c0_i32_1 = arith.constant 0 : i32
    return %c0_i32, %c0_i32_0 : i32, i32
  }
  func.func @transform_8(%arg0: i32) -> (i32, i32) {
    %c0_i32 = arith.constant 0 : i32
    %c0_i32_0 = arith.constant 0 : i32
    %c0_i32_1 = arith.constant 0 : i32
    return %c0_i32, %c0_i32_0 : i32, i32
  }
  func.func @transform_9(%arg0: i32) -> (i32, i32) {
    %c0_i32 = arith.constant 0 : i32
    %c0_i32_0 = arith.constant 0 : i32
    return %arg0, %c0_i32 : i32, i32
  }
}

</mosaic_0001>

<llo_original>
// kernel: denoiser_forward.1
$region0: #{denoiser_forward.1}
  #allocation0 [shape = 'u32[]', space=smem, size = 0x4, offset = 0x4, fixed_abs, tag = 'smem constant byte address 0x4 - core index']
  #allocation1 [shape = 'u32[144,128]{1,0:T(1,128)}', space=vmem, size = 0x12000, scoped, tag = 'internal scratch']
  %s0 = inlined_call_operand.vmem [shape: f32[8,16], index: 0, kind: input, shape index: {}]
  %s1 = inlined_call_operand.vmem [shape: f32[8,2], index: 1, kind: input, shape index: {}]
  %s2 = inlined_call_operand.vmem [shape: f32[16,32], index: 2, kind: input, shape index: {}]
  %s3 = inlined_call_operand.vmem [shape: f32[2,32], index: 3, kind: input, shape index: {}]
  %s4 = inlined_call_operand.vmem [shape: f32[1,32], index: 4, kind: input, shape index: {}]
  %s5 = inlined_call_operand.vmem [shape: f32[32,32], index: 5, kind: input, shape index: {}]
  %s6 = inlined_call_operand.vmem [shape: f32[1,32], index: 6, kind: input, shape index: {}]
  %s7 = inlined_call_operand.vmem [shape: f32[32,16], index: 7, kind: input, shape index: {}]
  %s8 = inlined_call_operand.vmem [shape: f32[1,16], index: 8, kind: input, shape index: {}]
  %s9 = inlined_call_operand.hbm [shape: f32[8,16], index: 9, kind: output, shape index: {}]
  %s10 = sld [smem:[#allocation0]]
  $region46: #{denoiser_forward.1} parent=0
    _
  %s12 = ssub.s32 1, %s10
  %s13 = scalar_select 0, %s12, %s10
  $region1: #{denoiser_forward.1} parent=0
    #allocation2 [shape = 'u8[4096]{0}', space=vmem, size = 0x1000, scoped, tag = 'output window, operand 0, single buffered']
    #allocation3 [shape = 's32[1]{0}', space=sflag, size = 0x4, scoped, tag = 'scoped memory for denoiser_forward.1']
    %14 = vsyncpa [#allocation3], 0
    // Predicated region
    $region2: #{denoiser_forward.1} parent=1 // pred_check
      _
    $region3: #{denoiser_forward.1} parent=1 // pred_check_branch
      %16 = sbr.rel (0) target = $region5
    $region4: #{denoiser_forward.1} parent=1 // pred_region
      _
    $region5: #{denoiser_forward.1} parent=1 // pred_fallthru
      _
    // Predicated region
    $region6: #{denoiser_forward.1} parent=1 // pred_check
      _
    $region7: #{denoiser_forward.1} parent=1 // pred_check_branch
      %18 = sbr.rel (0) target = $region9
    $region8: #{denoiser_forward.1} parent=1 // pred_region
      _
    $region9: #{denoiser_forward.1} parent=1 // pred_fallthru
      _
    // Predicated region
    $region10: #{denoiser_forward.1} parent=1 // pred_check
      _
    $region11: #{denoiser_forward.1} parent=1 // pred_check_branch
      %20 = sbr.rel (0) target = $region13
    $region12: #{denoiser_forward.1} parent=1 // pred_region
      _
    $region13: #{denoiser_forward.1} parent=1 // pred_fallthru
      _
    // Predicated region
    $region14: #{denoiser_forward.1} parent=1 // pred_check
      _
    $region15: #{denoiser_forward.1} parent=1 // pred_check_branch
      %22 = sbr.rel (0) target = $region17
    $region16: #{denoiser_forward.1} parent=1 // pred_region
      _
    $region17: #{denoiser_forward.1} parent=1 // pred_fallthru
      _
    // Predicated region
    $region18: #{denoiser_forward.1} parent=1 // pred_check
      _
    $region19: #{denoiser_forward.1} parent=1 // pred_check_branch
      %24 = sbr.rel (0) target = $region21
    $region20: #{denoiser_forward.1} parent=1 // pred_region
      _
    $region21: #{denoiser_forward.1} parent=1 // pred_fallthru
      _
    // Predicated region
    $region22: #{denoiser_forward.1} parent=1 // pred_check
      _
    $region23: #{denoiser_forward.1} parent=1 // pred_check_branch
      %26 = sbr.rel (0) target = $region25
    $region24: #{denoiser_forward.1} parent=1 // pred_region
      _
    $region25: #{denoiser_forward.1} parent=1 // pred_fallthru
      _
    // Predicated region
    $region26: #{denoiser_forward.1} parent=1 // pred_check
      _
    $region27: #{denoiser_forward.1} parent=1 // pred_check_branch
      %28 = sbr.rel (0) target = $region29
    $region28: #{denoiser_forward.1} parent=1 // pred_region
      _
    $region29: #{denoiser_forward.1} parent=1 // pred_fallthru
      _
    // Predicated region
    $region30: #{denoiser_forward.1} parent=1 // pred_check
      _
    $region31: #{denoiser_forward.1} parent=1 // pred_check_branch
      %30 = sbr.rel (0) target = $region33
    $region32: #{denoiser_forward.1} parent=1 // pred_region
      _
    $region33: #{denoiser_forward.1} parent=1 // pred_fallthru
      _
    // Predicated region
    $region34: #{denoiser_forward.1} parent=1 // pred_check
      _
    $region35: #{denoiser_forward.1} parent=1 // pred_check_branch
      %32 = sbr.rel (0) target = $region37
    $region36: #{denoiser_forward.1} parent=1 // pred_region
      _
    $region37: #{denoiser_forward.1} parent=1 // pred_fallthru
      _
    %v33 = vld [vmem:[%s2] sm:$0xff]
    %v34 = vld [vmem:[%s2 + $0x8] sm:$0xff]
    %v35 = vld [vmem:[%s0] sm:$0xff]
    %v36 = vld [vmem:[%s1] sm:$0xff]
    %v37 = vld [vmem:[%s3] sm:$0x3]
    %39 = vset.pattern.permute.xlu0 0
    %40 = vperm.xlu0 %39, %v36
    %v41 = vpop.permute.xlu0 %40
    %v43 = vlaneseq
    %v44 = vshrl.u32 %v43, 7
    %v45 = vsub.s32 0, %v44
    %v46 = vrot.slane %v37, %v45
    %v47 = vmul.f32 %v41, %v46
    %vm48 = vcmask 130048
    %v50 = vsel %vm48, %v35, 0
    %52 = vmatprep.subr.mxu0 0.0
    %v53 = vand.u32 %v33, 4294901760
    %54 = vmatpush1.msra.mxu0 %v53
    %55 = vmatprep.subr.mxu0 0.0
    %v56 = vand.u32 %v34, 4294901760
    %57 = vmatpush1.msra.mxu0 %v56
    %58 = vmatprep.subr.mxu0 0.0
    %59 = vmatpush1.msra.mxu0 0.0
    %60 = vmatprep.subr.mxu0 0.0
    %61 = vmatpush1.msra.mxu0 0.0
    %62 = vmatprep.subr.mxu0 0.0
    %63 = vmatpush1.msra.mxu0 0.0
    %64 = vmatprep.subr.mxu0 0.0
    %65 = vmatpush1.msra.mxu0 0.0
    %66 = vmatprep.subr.mxu0 0.0
    %67 = vmatpush1.msra.mxu0 0.0
    %68 = vmatprep.subr.mxu0 0.0
    %69 = vmatpush1.msra.mxu0 0.0
    %70 = vmatprep.subr.mxu0 0.0
    %71 = vmatpush1.msra.mxu0 0.0
    %72 = vmatprep.subr.mxu0 0.0
    %73 = vmatpush1.msra.mxu0 0.0
    %74 = vmatprep.subr.mxu0 0.0
    %75 = vmatpush1.msra.mxu0 0.0
    %76 = vmatprep.subr.mxu0 0.0
    %77 = vmatpush1.msra.mxu0 0.0
    %78 = vmatprep.subr.mxu0 0.0
    %79 = vmatpush1.msra.mxu0 0.0
    %80 = vmatprep.subr.mxu0 0.0
    %81 = vmatpush1.msra.mxu0 0.0
    %82 = vmatprep.subr.mxu0 0.0
    %83 = vmatpush1.msra.mxu0 0.0
    %84 = vmatprep.subr.mxu0 0.0
    %85 = vmatpush1.msra.mxu0 0.0
    %86 = vmatprep.subr.mxu0 0.0
    %87 = vmatpush1.msra.mxu0 0.0
    %88 = vmatprep.subr.mxu0 0.0
    %89 = vmatpush1.msra.mxu0 0.0
    %90 = vmatprep.subr.mxu0 0.0
    %91 = vmatpush1.msra.mxu0 0.0
    %92 = vmatprep.subr.mxu0 0.0
    %93 = vmatpush1.msra.mxu0 0.0
    %94 = vmatprep.subr.mxu0 0.0
    %95 = vmatpush1.msra.mxu0 0.0
    %96 = vmatprep.subr.mxu0 0.0
    %97 = vmatpush1.msra.mxu0 0.0
    %98 = vmatprep.subr.mxu0 0.0
    %99 = vmatpush1.msra.mxu0 0.0
    %100 = vmatprep.subr.mxu0 0.0
    %101 = vmatpush1.msra.mxu0 0.0
    %102 = vmatprep.subr.mxu0 0.0
    %103 = vmatpush1.msra.mxu0 0.0
    %104 = vmatprep.subr.mxu0 0.0
    %105 = vmatpush1.msra.mxu0 0.0
    %106 = vmatprep.subr.mxu0 0.0
    %107 = vmatpush1.msra.mxu0 0.0
    %108 = vmatprep.subr.mxu0 0.0
    %109 = vmatpush1.msra.mxu0 0.0
    %110 = vmatprep.subr.mxu0 0.0
    %111 = vmatpush1.msra.mxu0 0.0
    %112 = vmatprep.subr.mxu0 0.0
    %113 = vmatpush1.msra.mxu0 0.0
    %114 = vmatprep.subr.mxu0 0.0
    %115 = vmatpush1.msra.mxu0 0.0
    %116 = vmatprep.subr.mxu0 0.0
    %117 = vmatpush1.msra.mxu0 0.0
    %118 = vmatprep.mubr.f32.mxu0 0.0
    %v119 = vand.u32 %v50, 4294901760
    %v120 = vsub.f32 %v50, %v119
    %v121 = vand.u32 %v120, 4294901760
    %v122 = vsub.f32 %v120, %v121
    %v123 = vand.u32 %v122, 4294901760
    %124 = vmatmul.mubr.f32.gmra.mrb[0].mxu0 %v123
    %v125 = vpop.f32.mrb[0].mxu0
    %v126 = vadd.f32 %v47, %v125
    %v127 = vpop.f32.mrb[0].mxu0
    %128 = vdwg.mxu0
    %129 = vmatprep.subr.mxu0 0.0
    %v130 = vand.u32 %v33, 4294901760
    %v131 = vsub.f32 %v33, %v130
    %v132 = vand.u32 %v131, 4294901760
    %v133 = vsub.f32 %v131, %v132
    %v134 = vand.u32 %v133, 4294901760
    %135 = vmatpush1.msra.mxu0 %v134
    %136 = vmatprep.subr.mxu0 0.0
    %v137 = vand.u32 %v34, 4294901760
    %v138 = vsub.f32 %v34, %v137
    %v139 = vand.u32 %v138, 4294901760
    %v140 = vsub.f32 %v138, %v139
    %v141 = vand.u32 %v140, 4294901760
    %142 = vmatpush1.msra.mxu0 %v141
    %143 = vmatprep.subr.mxu0 0.0
    %144 = vmatpush1.msra.mxu0 0.0
    %145 = vmatprep.subr.mxu0 0.0
    %146 = vmatpush1.msra.mxu0 0.0
    %147 = vmatprep.subr.mxu0 0.0
    %148 = vmatpush1.msra.mxu0 0.0
    %149 = vmatprep.subr.mxu0 0.0
    %150 = vmatpush1.msra.mxu0 0.0
    %151 = vmatprep.subr.mxu0 0.0
    %152 = vmatpush1.msra.mxu0 0.0
    %153 = vmatprep.subr.mxu0 0.0
    %154 = vmatpush1.msra.mxu0 0.0
    %155 = vmatprep.subr.mxu0 0.0
    %156 = vmatpush1.msra.mxu0 0.0
    %157 = vmatprep.subr.mxu0 0.0
    %158 = vmatpush1.msra.mxu0 0.0
    %159 = vmatprep.subr.mxu0 0.0
    %160 = vmatpush1.msra.mxu0 0.0
    %161 = vmatprep.subr.mxu0 0.0
    %162 = vmatpush1.msra.mxu0 0.0
    %163 = vmatprep.subr.mxu0 0.0
    %164 = vmatpush1.msra.mxu0 0.0
    %165 = vmatprep.subr.mxu0 0.0
    %166 = vmatpush1.msra.mxu0 0.0
    %167 = vmatprep.subr.mxu0 0.0
    %168 = vmatpush1.msra.mxu0 0.0
    %169 = vmatprep.subr.mxu0 0.0
    %170 = vmatpush1.msra.mxu0 0.0
    %171 = vmatprep.subr.mxu0 0.0
    %172 = vmatpush1.msra.mxu0 0.0
    %173 = vmatprep.subr.mxu0 0.0
    %174 = vmatpush1.msra.mxu0 0.0
    %175 = vmatprep.subr.mxu0 0.0
    %176 = vmatpush1.msra.mxu0 0.0
    %177 = vmatprep.subr.mxu0 0.0
    %178 = vmatpush1.msra.mxu0 0.0
    %179 = vmatprep.subr.mxu0 0.0
    %180 = vmatpush1.msra.mxu0 0.0
    %181 = vmatprep.subr.mxu0 0.0
    %182 = vmatpush1.msra.mxu0 0.0
    %183 = vmatprep.subr.mxu0 0.0
    %184 = vmatpush1.msra.mxu0 0.0
    %185 = vmatprep.subr.mxu0 0.0
    %186 = vmatpush1.msra.mxu0 0.0
    %187 = vmatprep.subr.mxu0 0.0
    %188 = vmatpush1.msra.mxu0 0.0
    %189 = vmatprep.subr.mxu0 0.0
    %190 = vmatpush1.msra.mxu0 0.0
    %191 = vmatprep.subr.mxu0 0.0
    %192 = vmatpush1.msra.mxu0 0.0
    %193 = vmatprep.subr.mxu0 0.0
    %194 = vmatpush1.msra.mxu0 0.0
    %195 = vmatprep.subr.mxu0 0.0
    %196 = vmatpush1.msra.mxu0 0.0
    %197 = vmatprep.subr.mxu0 0.0
    %198 = vmatpush1.msra.mxu0 0.0
    %199 = vmatprep.subr.mxu0 0.0
    %200 = vmatpush1.msra.mxu0 0.0
    %201 = vmatprep.subr.mxu0 0.0
    %202 = vmatpush1.msra.mxu0 0.0
    %203 = vmatprep.mubr.f32.mxu0 0.0
    %v204 = vand.u32 %v50, 4294901760
    %205 = vmatmul.mubr.f32.gmra.mrb[0].mxu0 %v204
    %v206 = vpop.f32.mrb[0].mxu0
    %v207 = vadd.f32 %v126, %v206
    %v208 = vpop.f32.mrb[0].mxu0
    %209 = vdwg.mxu0
    %210 = vmatprep.subr.mxu0 0.0
    %v211 = vand.u32 %v33, 4294901760
    %v212 = vsub.f32 %v33, %v211
    %213 = vmatpush1.msra.mxu0 %v212
    %214 = vmatprep.subr.mxu0 0.0
    %v215 = vand.u32 %v34, 4294901760
    %v216 = vsub.f32 %v34, %v215
    %217 = vmatpush1.msra.mxu0 %v216
    %218 = vmatprep.subr.mxu0 0.0
    %219 = vmatpush1.msra.mxu0 0.0
    %220 = vmatprep.subr.mxu0 0.0
    %221 = vmatpush1.msra.mxu0 0.0
    %222 = vmatprep.subr.mxu0 0.0
    %223 = vmatpush1.msra.mxu0 0.0
    %224 = vmatprep.subr.mxu0 0.0
    %225 = vmatpush1.msra.mxu0 0.0
    %226 = vmatprep.subr.mxu0 0.0
    %227 = vmatpush1.msra.mxu0 0.0
    %228 = vmatprep.subr.mxu0 0.0
    %229 = vmatpush1.msra.mxu0 0.0
    %230 = vmatprep.subr.mxu0 0.0
    %231 = vmatpush1.msra.mxu0 0.0
    %232 = vmatprep.subr.mxu0 0.0
    %233 = vmatpush1.msra.mxu0 0.0
    %234 = vmatprep.subr.mxu0 0.0
    %235 = vmatpush1.msra.mxu0 0.0
    %236 = vmatprep.subr.mxu0 0.0
    %237 = vmatpush1.msra.mxu0 0.0
    %238 = vmatprep.subr.mxu0 0.0
    %239 = vmatpush1.msra.mxu0 0.0
    %240 = vmatprep.subr.mxu0 0.0
    %241 = vmatpush1.msra.mxu0 0.0
    %242 = vmatprep.subr.mxu0 0.0
    %243 = vmatpush1.msra.mxu0 0.0
    %244 = vmatprep.subr.mxu0 0.0
    %245 = vmatpush1.msra.mxu0 0.0
    %246 = vmatprep.subr.mxu0 0.0
    %247 = vmatpush1.msra.mxu0 0.0
    %248 = vmatprep.subr.mxu0 0.0
    %249 = vmatpush1.msra.mxu0 0.0
    %250 = vmatprep.subr.mxu0 0.0
    %251 = vmatpush1.msra.mxu0 0.0
    %252 = vmatprep.subr.mxu0 0.0
    %253 = vmatpush1.msra.mxu0 0.0
    %254 = vmatprep.subr.mxu0 0.0
    %255 = vmatpush1.msra.mxu0 0.0
    %256 = vmatprep.subr.mxu0 0.0
    %257 = vmatpush1.msra.mxu0 0.0
    %258 = vmatprep.subr.mxu0 0.0
    %259 = vmatpush1.msra.mxu0 0.0
    %260 = vmatprep.subr.mxu0 0.0
    %261 = vmatpush1.msra.mxu0 0.0
    %262 = vmatprep.subr.mxu0 0.0
    %263 = vmatpush1.msra.mxu0 0.0
    %264 = vmatprep.subr.mxu0 0.0
    %265 = vmatpush1.msra.mxu0 0.0
    %266 = vmatprep.subr.mxu0 0.0
    %267 = vmatpush1.msra.mxu0 0.0
    %268 = vmatprep.subr.mxu0 0.0
    %269 = vmatpush1.msra.mxu0 0.0
    %270 = vmatprep.subr.mxu0 0.0
    %271 = vmatpush1.msra.mxu0 0.0
    %272 = vmatprep.subr.mxu0 0.0
    %273 = vmatpush1.msra.mxu0 0.0
    %274 = vmatprep.subr.mxu0 0.0
    %275 = vmatpush1.msra.mxu0 0.0
    %276 = vmatprep.subr.mxu0 0.0
    %277 = vmatpush1.msra.mxu0 0.0
    %278 = vmatprep.mubr.f32.mxu0 0.0
    %v279 = vand.u32 %v50, 4294901760
    %v280 = vsub.f32 %v50, %v279
    %281 = vmatmul.mubr.f32.gmra.mrb[0].mxu0 %v280
    %v282 = vpop.f32.mrb[0].mxu0
    %v283 = vadd.f32 %v207, %v282
    %v284 = vpop.f32.mrb[0].mxu0
    %285 = vdwg.mxu0
    %286 = vmatprep.subr.mxu0 0.0
    %v287 = vand.u32 %v33, 4294901760
    %288 = vmatpush1.msra.mxu0 %v287
    %289 = vmatprep.subr.mxu0 0.0
    %v290 = vand.u32 %v34, 4294901760
    %291 = vmatpush1.msra.mxu0 %v290
    %292 = vmatprep.subr.mxu0 0.0
    %293 = vmatpush1.msra.mxu0 0.0
    %294 = vmatprep.subr.mxu0 0.0
    %295 = vmatpush1.msra.mxu0 0.0
    %296 = vmatprep.subr.mxu0 0.0
    %297 = vmatpush1.msra.mxu0 0.0
    %298 = vmatprep.subr.mxu0 0.0
    %299 = vmatpush1.msra.mxu0 0.0
    %300 = vmatprep.subr.mxu0 0.0
    %301 = vmatpush1.msra.mxu0 0.0
    %302 = vmatprep.subr.mxu0 0.0
    %303 = vmatpush1.msra.mxu0 0.0
    %304 = vmatprep.subr.mxu0 0.0
    %305 = vmatpush1.msra.mxu0 0.0
    %306 = vmatprep.subr.mxu0 0.0
    %307 = vmatpush1.msra.mxu0 0.0
    %308 = vmatprep.subr.mxu0 0.0
    %309 = vmatpush1.msra.mxu0 0.0
    %310 = vmatprep.subr.mxu0 0.0
    %311 = vmatpush1.msra.mxu0 0.0
    %312 = vmatprep.subr.mxu0 0.0
    %313 = vmatpush1.msra.mxu0 0.0
    %314 = vmatprep.subr.mxu0 0.0
    %315 = vmatpush1.msra.mxu0 0.0
    %316 = vmatprep.subr.mxu0 0.0
    %317 = vmatpush1.msra.mxu0 0.0
    %318 = vmatprep.subr.mxu0 0.0
    %319 = vmatpush1.msra.mxu0 0.0
    %320 = vmatprep.subr.mxu0 0.0
    %321 = vmatpush1.msra.mxu0 0.0
    %322 = vmatprep.subr.mxu0 0.0
    %323 = vmatpush1.msra.mxu0 0.0
    %324 = vmatprep.subr.mxu0 0.0
    %325 = vmatpush1.msra.mxu0 0.0
    %326 = vmatprep.subr.mxu0 0.0
    %327 = vmatpush1.msra.mxu0 0.0
    %328 = vmatprep.subr.mxu0 0.0
    %329 = vmatpush1.msra.mxu0 0.0
    %330 = vmatprep.subr.mxu0 0.0
    %331 = vmatpush1.msra.mxu0 0.0
    %332 = vmatprep.subr.mxu0 0.0
    %333 = vmatpush1.msra.mxu0 0.0
    %334 = vmatprep.subr.mxu0 0.0
    %335 = vmatpush1.msra.mxu0 0.0
    %336 = vmatprep.subr.mxu0 0.0
    %337 = vmatpush1.msra.mxu0 0.0
    %338 = vmatprep.subr.mxu0 0.0
    %339 = vmatpush1.msra.mxu0 0.0
    %340 = vmatprep.subr.mxu0 0.0
    %341 = vmatpush1.msra.mxu0 0.0
    %342 = vmatprep.subr.mxu0 0.0
    %343 = vmatpush1.msra.mxu0 0.0
    %344 = vmatprep.subr.mxu0 0.0
    %345 = vmatpush1.msra.mxu0 0.0
    %346 = vmatprep.subr.mxu0 0.0
    %347 = vmatpush1.msra.mxu0 0.0
    %348 = vmatprep.subr.mxu0 0.0
    %349 = vmatpush1.msra.mxu0 0.0
    %350 = vmatprep.subr.mxu0 0.0
    %351 = vmatpush1.msra.mxu0 0.0
    %352 = vmatprep.mubr.f32.mxu0 0.0
    %v353 = vand.u32 %v50, 4294901760
    %v354 = vsub.f32 %v50, %v353
    %v355 = vand.u32 %v354, 4294901760
    %356 = vmatmul.mubr.f32.gmra.mrb[0].mxu0 %v355
    %v357 = vpop.f32.mrb[0].mxu0
    %v358 = vadd.f32 %v283, %v357
    %v359 = vpop.f32.mrb[0].mxu0
    %360 = vdwg.mxu0
    %361 = vmatprep.subr.mxu0 0.0
    %v362 = vand.u32 %v33, 4294901760
    %v363 = vsub.f32 %v33, %v362
    %v364 = vand.u32 %v363, 4294901760
    %365 = vmatpush1.msra.mxu0 %v364
    %366 = vmatprep.subr.mxu0 0.0
    %v367 = vand.u32 %v34, 4294901760
    %v368 = vsub.f32 %v34, %v367
    %v369 = vand.u32 %v368, 4294901760
    %370 = vmatpush1.msra.mxu0 %v369
    %371 = vmatprep.subr.mxu0 0.0
    %372 = vmatpush1.msra.mxu0 0.0
    %373 = vmatprep.subr.mxu0 0.0
    %374 = vmatpush1.msra.mxu0 0.0
    %375 = vmatprep.subr.mxu0 0.0
    %376 = vmatpush1.msra.mxu0 0.0
    %377 = vmatprep.subr.mxu0 0.0
    %378 = vmatpush1.msra.mxu0 0.0
    %379 = vmatprep.subr.mxu0 0.0
    %380 = vmatpush1.msra.mxu0 0.0
    %381 = vmatprep.subr.mxu0 0.0
    %382 = vmatpush1.msra.mxu0 0.0
    %383 = vmatprep.subr.mxu0 0.0
    %384 = vmatpush1.msra.mxu0 0.0
    %385 = vmatprep.subr.mxu0 0.0
    %386 = vmatpush1.msra.mxu0 0.0
    %387 = vmatprep.subr.mxu0 0.0
    %388 = vmatpush1.msra.mxu0 0.0
    %389 = vmatprep.subr.mxu0 0.0
    %390 = vmatpush1.msra.mxu0 0.0
    %391 = vmatprep.subr.mxu0 0.0
    %392 = vmatpush1.msra.mxu0 0.0
    %393 = vmatprep.subr.mxu0 0.0
    %394 = vmatpush1.msra.mxu0 0.0
    %395 = vmatprep.subr.mxu0 0.0
    %396 = vmatpush1.msra.mxu0 0.0
    %397 = vmatprep.subr.mxu0 0.0
    %398 = vmatpush1.msra.mxu0 0.0
    %399 = vmatprep.subr.mxu0 0.0
    %400 = vmatpush1.msra.mxu0 0.0
    %401 = vmatprep.subr.mxu0 0.0
    %402 = vmatpush1.msra.mxu0 0.0
    %403 = vmatprep.subr.mxu0 0.0
    %404 = vmatpush1.msra.mxu0 0.0
    %405 = vmatprep.subr.mxu0 0.0
    %406 = vmatpush1.msra.mxu0 0.0
    %407 = vmatprep.subr.mxu0 0.0
    %408 = vmatpush1.msra.mxu0 0.0
    %409 = vmatprep.subr.mxu0 0.0
    %410 = vmatpush1.msra.mxu0 0.0
    %411 = vmatprep.subr.mxu0 0.0
    %412 = vmatpush1.msra.mxu0 0.0
    %413 = vmatprep.subr.mxu0 0.0
    %414 = vmatpush1.msra.mxu0 0.0
    %415 = vmatprep.subr.mxu0 0.0
    %416 = vmatpush1.msra.mxu0 0.0
    %417 = vmatprep.subr.mxu0 0.0
    %418 = vmatpush1.msra.mxu0 0.0
    %419 = vmatprep.subr.mxu0 0.0
    %420 = vmatpush1.msra.mxu0 0.0
    %421 = vmatprep.subr.mxu0 0.0
    %422 = vmatpush1.msra.mxu0 0.0
    %423 = vmatprep.subr.mxu0 0.0
    %424 = vmatpush1.msra.mxu0 0.0
    %425 = vmatprep.subr.mxu0 0.0
    %426 = vmatpush1.msra.mxu0 0.0
    %427 = vmatprep.subr.mxu0 0.0
    %428 = vmatpush1.msra.mxu0 0.0
    %429 = vmatprep.subr.mxu0 0.0
    %430 = vmatpush1.msra.mxu0 0.0
    %431 = vmatprep.mubr.f32.mxu0 0.0
    %v432 = vand.u32 %v50, 4294901760
    %433 = vmatmul.mubr.f32.gmra.mrb[0].mxu0 %v432
    %v434 = vpop.f32.mrb[0].mxu0
    %v435 = vadd.f32 %v358, %v434
    %v436 = vpop.f32.mrb[0].mxu0
    %437 = vdwg.mxu0
    %438 = vmatprep.subr.mxu0 0.0
    %v439 = vand.u32 %v33, 4294901760
    %440 = vmatpush1.msra.mxu0 %v439
    %441 = vmatprep.subr.mxu0 0.0
    %v442 = vand.u32 %v34, 4294901760
    %443 = vmatpush1.msra.mxu0 %v442
    %444 = vmatprep.subr.mxu0 0.0
    %445 = vmatpush1.msra.mxu0 0.0
    %446 = vmatprep.subr.mxu0 0.0
    %447 = vmatpush1.msra.mxu0 0.0
    %448 = vmatprep.subr.mxu0 0.0
    %449 = vmatpush1.msra.mxu0 0.0
    %450 = vmatprep.subr.mxu0 0.0
    %451 = vmatpush1.msra.mxu0 0.0
    %452 = vmatprep.subr.mxu0 0.0
    %453 = vmatpush1.msra.mxu0 0.0
    %454 = vmatprep.subr.mxu0 0.0
    %455 = vmatpush1.msra.mxu0 0.0
    %456 = vmatprep.subr.mxu0 0.0
    %457 = vmatpush1.msra.mxu0 0.0
    %458 = vmatprep.subr.mxu0 0.0
    %459 = vmatpush1.msra.mxu0 0.0
    %460 = vmatprep.subr.mxu0 0.0
    %461 = vmatpush1.msra.mxu0 0.0
    %462 = vmatprep.subr.mxu0 0.0
    %463 = vmatpush1.msra.mxu0 0.0
    %464 = vmatprep.subr.mxu0 0.0
    %465 = vmatpush1.msra.mxu0 0.0
    %466 = vmatprep.subr.mxu0 0.0
    %467 = vmatpush1.msra.mxu0 0.0
    %468 = vmatprep.subr.mxu0 0.0
    %469 = vmatpush1.msra.mxu0 0.0
    %470 = vmatprep.subr.mxu0 0.0
    %471 = vmatpush1.msra.mxu0 0.0
    %472 = vmatprep.subr.mxu0 0.0
    %473 = vmatpush1.msra.mxu0 0.0
    %474 = vmatprep.subr.mxu0 0.0
    %475 = vmatpush1.msra.mxu0 0.0
    %476 = vmatprep.subr.mxu0 0.0
    %477 = vmatpush1.msra.mxu0 0.0
    %478 = vmatprep.subr.mxu0 0.0
    %479 = vmatpush1.msra.mxu0 0.0
    %480 = vmatprep.subr.mxu0 0.0
    %481 = vmatpush1.msra.mxu0 0.0
    %482 = vmatprep.subr.mxu0 0.0
    %483 = vmatpush1.msra.mxu0 0.0
    %484 = vmatprep.subr.mxu0 0.0
    %485 = vmatpush1.msra.mxu0 0.0
    %486 = vmatprep.subr.mxu0 0.0
    %487 = vmatpush1.msra.mxu0 0.0
    %488 = vmatprep.subr.mxu0 0.0
    %489 = vmatpush1.msra.mxu0 0.0
    %490 = vmatprep.subr.mxu0 0.0
    %491 = vmatpush1.msra.mxu0 0.0
    %492 = vmatprep.subr.mxu0 0.0
    %493 = vmatpush1.msra.mxu0 0.0
    %494 = vmatprep.subr.mxu0 0.0
    %495 = vmatpush1.msra.mxu0 0.0
    %496 = vmatprep.subr.mxu0 0.0
    %497 = vmatpush1.msra.mxu0 0.0
    %498 = vmatprep.subr.mxu0 0.0
    %499 = vmatpush1.msra.mxu0 0.0
    %500 = vmatprep.subr.mxu0 0.0
    %501 = vmatpush1.msra.mxu0 0.0
    %502 = vmatprep.subr.mxu0 0.0
    %503 = vmatpush1.msra.mxu0 0.0
    %504 = vmatprep.mubr.f32.mxu0 0.0
    %v505 = vand.u32 %v50, 4294901760
    %506 = vmatmul.mubr.f32.gmra.mrb[0].mxu0 %v505
    %v507 = vpop.f32.mrb[0].mxu0
    %v508 = vadd.f32 %v435, %v507
    %v509 = vpop.f32.mrb[0].mxu0
    %510 = vdwg.mxu0
    %511 = vset.pattern.permute.xlu0 1
    %512 = vperm.xlu0 %511, %v36
    %v513 = vpop.permute.xlu0 %512
    %v515 = vlaneseq
    %v516 = vshrl.u32 %v515, 7
    %v517 = vsub.s32 1, %v516
    %v518 = vrot.slane %v37, %v517
    %v519 = vmul.f32 %v513, %v518
    %v520 = vadd.f32 %v508, %v519
    %v521 = vld [vmem:[%s4] sm:$0x1]
    %v523 = vlaneseq
    %v524 = vshrl.u32 %v523, 7
    %v525 = vsub.s32 0, %v524
    %v526 = vrot.slane %v521, %v525
    %v528 = vadd.f32 %v520, %v526
    %v529 = vmul.f32 %v528, 0.5
    %v530 = vmul.f32 %v528, 0.70710677
    %v531 = verf.f32.pop %v530
    %v532 = vadd.f32 %v531, 1.0
    %v533 = vmul.f32 %v529, %v532
    %v534 = vld [vmem:[%s5] sm:$0xff]
    %v535 = vld [vmem:[%s5 + $0x8] sm:$0xff]
    %v536 = vld [vmem:[%s5 + $0x10] sm:$0xff]
    %v537 = vld [vmem:[%s5 + $0x18] sm:$0xff]
    %v538 = vld [vmem:[%s6] sm:$0x1]
    %v540 = vlaneseq
    %v541 = vshrl.u32 %v540, 7
    %v542 = vsub.s32 0, %v541
    %v543 = vrot.slane %v538, %v542
    %vm545 = vcmask 261120
    %v547 = vsel %vm545, %v533, 0
    %549 = vmatprep.subr.mxu0 0.0
    %v550 = vand.u32 %v534, 4294901760
    %551 = vmatpush1.msra.mxu0 %v550
    %552 = vmatprep.subr.mxu0 0.0
    %v553 = vand.u32 %v535, 4294901760
    %554 = vmatpush1.msra.mxu0 %v553
    %555 = vmatprep.subr.mxu0 0.0
    %v556 = vand.u32 %v536, 4294901760
    %557 = vmatpush1.msra.mxu0 %v556
    %558 = vmatprep.subr.mxu0 0.0
    %v559 = vand.u32 %v537, 4294901760
    %560 = vmatpush1.msra.mxu0 %v559
    %561 = vmatprep.subr.mxu0 0.0
    %562 = vmatpush1.msra.mxu0 0.0
    %563 = vmatprep.subr.mxu0 0.0
    %564 = vmatpush1.msra.mxu0 0.0
    %565 = vmatprep.subr.mxu0 0.0
    %566 = vmatpush1.msra.mxu0 0.0
    %567 = vmatprep.subr.mxu0 0.0
    %568 = vmatpush1.msra.mxu0 0.0
    %569 = vmatprep.subr.mxu0 0.0
    %570 = vmatpush1.msra.mxu0 0.0
    %571 = vmatprep.subr.mxu0 0.0
    %572 = vmatpush1.msra.mxu0 0.0
    %573 = vmatprep.subr.mxu0 0.0
    %574 = vmatpush1.msra.mxu0 0.0
    %575 = vmatprep.subr.mxu0 0.0
    %576 = vmatpush1.msra.mxu0 0.0
    %577 = vmatprep.subr.mxu0 0.0
    %578 = vmatpush1.msra.mxu0 0.0
    %579 = vmatprep.subr.mxu0 0.0
    %580 = vmatpush1.msra.mxu0 0.0
    %581 = vmatprep.subr.mxu0 0.0
    %582 = vmatpush1.msra.mxu0 0.0
    %583 = vmatprep.subr.mxu0 0.0
    %584 = vmatpush1.msra.mxu0 0.0
    %585 = vmatprep.subr.mxu0 0.0
    %586 = vmatpush1.msra.mxu0 0.0
    %587 = vmatprep.subr.mxu0 0.0
    %588 = vmatpush1.msra.mxu0 0.0
    %589 = vmatprep.subr.mxu0 0.0
    %590 = vmatpush1.msra.mxu0 0.0
    %591 = vmatprep.subr.mxu0 0.0
    %592 = vmatpush1.msra.mxu0 0.0
    %593 = vmatprep.subr.mxu0 0.0
    %594 = vmatpush1.msra.mxu0 0.0
    %595 = vmatprep.subr.mxu0 0.0
    %596 = vmatpush1.msra.mxu0 0.0
    %597 = vmatprep.subr.mxu0 0.0
    %598 = vmatpush1.msra.mxu0 0.0
    %599 = vmatprep.subr.mxu0 0.0
    %600 = vmatpush1.msra.mxu0 0.0
    %601 = vmatprep.subr.mxu0 0.0
    %602 = vmatpush1.msra.mxu0 0.0
    %603 = vmatprep.subr.mxu0 0.0
    %604 = vmatpush1.msra.mxu0 0.0
    %605 = vmatprep.subr.mxu0 0.0
    %606 = vmatpush1.msra.mxu0 0.0
    %607 = vmatprep.subr.mxu0 0.0
    %608 = vmatpush1.msra.mxu0 0.0
    %609 = vmatprep.subr.mxu0 0.0
    %610 = vmatpush1.msra.mxu0 0.0
    %611 = vmatprep.subr.mxu0 0.0
    %612 = vmatpush1.msra.mxu0 0.0
    %613 = vmatprep.subr.mxu0 0.0
    %614 = vmatpush1.msra.mxu0 0.0
    %615 = vmatprep.subr.mxu0 0.0
    %616 = vmatpush1.msra.mxu0 0.0
    %617 = vmatprep.mubr.f32.mxu0 0.0
    %v618 = vand.u32 %v547, 4294901760
    %v619 = vsub.f32 %v547, %v618
    %v620 = vand.u32 %v619, 4294901760
    %v621 = vsub.f32 %v619, %v620
    %v622 = vand.u32 %v621, 4294901760
    %623 = vmatmul.mubr.f32.gmra.mrb[0].mxu0 %v622
    %v624 = vpop.f32.mrb[0].mxu0
    %v625 = vadd.f32 %v543, %v624
    %v626 = vpop.f32.mrb[0].mxu0
    %627 = vdwg.mxu0
    %628 = vmatprep.subr.mxu0 0.0
    %v629 = vand.u32 %v534, 4294901760
    %v630 = vsub.f32 %v534, %v629
    %v631 = vand.u32 %v630, 4294901760
    %v632 = vsub.f32 %v630, %v631
    %v633 = vand.u32 %v632, 4294901760
    %634 = vmatpush1.msra.mxu0 %v633
    %635 = vmatprep.subr.mxu0 0.0
    %v636 = vand.u32 %v535, 4294901760
    %v637 = vsub.f32 %v535, %v636
    %v638 = vand.u32 %v637, 4294901760
    %v639 = vsub.f32 %v637, %v638
    %v640 = vand.u32 %v639, 4294901760
    %641 = vmatpush1.msra.mxu0 %v640
    %642 = vmatprep.subr.mxu0 0.0
    %v643 = vand.u32 %v536, 4294901760
    %v644 = vsub.f32 %v536, %v643
    %v645 = vand.u32 %v644, 4294901760
    %v646 = vsub.f32 %v644, %v645
    %v647 = vand.u32 %v646, 4294901760
    %648 = vmatpush1.msra.mxu0 %v647
    %649 = vmatprep.subr.mxu0 0.0
    %v650 = vand.u32 %v537, 4294901760
    %v651 = vsub.f32 %v537, %v650
    %v652 = vand.u32 %v651, 4294901760
    %v653 = vsub.f32 %v651, %v652
    %v654 = vand.u32 %v653, 4294901760
    %655 = vmatpush1.msra.mxu0 %v654
    %656 = vmatprep.subr.mxu0 0.0
    %657 = vmatpush1.msra.mxu0 0.0
    %658 = vmatprep.subr.mxu0 0.0
    %659 = vmatpush1.msra.mxu0 0.0
    %660 = vmatprep.subr.mxu0 0.0
    %661 = vmatpush1.msra.mxu0 0.0
    %662 = vmatprep.subr.mxu0 0.0
    %663 = vmatpush1.msra.mxu0 0.0
    %664 = vmatprep.subr.mxu0 0.0
    %665 = vmatpush1.msra.mxu0 0.0
    %666 = vmatprep.subr.mxu0 0.0
    %667 = vmatpush1.msra.mxu0 0.0
    %668 = vmatprep.subr.mxu0 0.0
    %669 = vmatpush1.msra.mxu0 0.0
    %670 = vmatprep.subr.mxu0 0.0
    %671 = vmatpush1.msra.mxu0 0.0
    %672 = vmatprep.subr.mxu0 0.0
    %673 = vmatpush1.msra.mxu0 0.0
    %674 = vmatprep.subr.mxu0 0.0
    %675 = vmatpush1.msra.mxu0 0.0
    %676 = vmatprep.subr.mxu0 0.0
    %677 = vmatpush1.msra.mxu0 0.0
    %678 = vmatprep.subr.mxu0 0.0
    %679 = vmatpush1.msra.mxu0 0.0
    %680 = vmatprep.subr.mxu0 0.0
    %681 = vmatpush1.msra.mxu0 0.0
    %682 = vmatprep.subr.mxu0 0.0
    %683 = vmatpush1.msra.mxu0 0.0
    %684 = vmatprep.subr.mxu0 0.0
    %685 = vmatpush1.msra.mxu0 0.0
    %686 = vmatprep.subr.mxu0 0.0
    %687 = vmatpush1.msra.mxu0 0.0
    %688 = vmatprep.subr.mxu0 0.0
    %689 = vmatpush1.msra.mxu0 0.0
    %690 = vmatprep.subr.mxu0 0.0
    %691 = vmatpush1.msra.mxu0 0.0
    %692 = vmatprep.subr.mxu0 0.0
    %693 = vmatpush1.msra.mxu0 0.0
    %694 = vmatprep.subr.mxu0 0.0
    %695 = vmatpush1.msra.mxu0 0.0
    %696 = vmatprep.subr.mxu0 0.0
    %697 = vmatpush1.msra.mxu0 0.0
    %698 = vmatprep.subr.mxu0 0.0
    %699 = vmatpush1.msra.mxu0 0.0
    %700 = vmatprep.subr.mxu0 0.0
    %701 = vmatpush1.msra.mxu0 0.0
    %702 = vmatprep.subr.mxu0 0.0
    %703 = vmatpush1.msra.mxu0 0.0
    %704 = vmatprep.subr.mxu0 0.0
    %705 = vmatpush1.msra.mxu0 0.0
    %706 = vmatprep.subr.mxu0 0.0
    %707 = vmatpush1.msra.mxu0 0.0
    %708 = vmatprep.subr.mxu0 0.0
    %709 = vmatpush1.msra.mxu0 0.0
    %710 = vmatprep.subr.mxu0 0.0
    %711 = vmatpush1.msra.mxu0 0.0
    %712 = vmatprep.mubr.f32.mxu0 0.0
    %v713 = vand.u32 %v547, 4294901760
    %714 = vmatmul.mubr.f32.gmra.mrb[0].mxu0 %v713
    %v715 = vpop.f32.mrb[0].mxu0
    %v716 = vadd.f32 %v625, %v715
    %v717 = vpop.f32.mrb[0].mxu0
    %718 = vdwg.mxu0
    %719 = vmatprep.subr.mxu0 0.0
    %v720 = vand.u32 %v534, 4294901760
    %v721 = vsub.f32 %v534, %v720
    %722 = vmatpush1.msra.mxu0 %v721
    %723 = vmatprep.subr.mxu0 0.0
    %v724 = vand.u32 %v535, 4294901760
    %v725 = vsub.f32 %v535, %v724
    %726 = vmatpush1.msra.mxu0 %v725
    %727 = vmatprep.subr.mxu0 0.0
    %v728 = vand.u32 %v536, 4294901760
    %v729 = vsub.f32 %v536, %v728
    %730 = vmatpush1.msra.mxu0 %v729
    %731 = vmatprep.subr.mxu0 0.0
    %v732 = vand.u32 %v537, 4294901760
    %v733 = vsub.f32 %v537, %v732
    %734 = vmatpush1.msra.mxu0 %v733
    %735 = vmatprep.subr.mxu0 0.0
    %736 = vmatpush1.msra.mxu0 0.0
    %737 = vmatprep.subr.mxu0 0.0
    %738 = vmatpush1.msra.mxu0 0.0
    %739 = vmatprep.subr.mxu0 0.0
    %740 = vmatpush1.msra.mxu0 0.0
    %741 = vmatprep.subr.mxu0 0.0
    %742 = vmatpush1.msra.mxu0 0.0
    %743 = vmatprep.subr.mxu0 0.0
    %744 = vmatpush1.msra.mxu0 0.0
    %745 = vmatprep.subr.mxu0 0.0
    %746 = vmatpush1.msra.mxu0 0.0
    %747 = vmatprep.subr.mxu0 0.0
    %748 = vmatpush1.msra.mxu0 0.0
    %749 = vmatprep.subr.mxu0 0.0
    %750 = vmatpush1.msra.mxu0 0.0
    %751 = vmatprep.subr.mxu0 0.0
    %752 = vmatpush1.msra.mxu0 0.0
    %753 = vmatprep.subr.mxu0 0.0
    %754 = vmatpush1.msra.mxu0 0.0
    %755 = vmatprep.subr.mxu0 0.0
    %756 = vmatpush1.msra.mxu0 0.0
    %757 = vmatprep.subr.mxu0 0.0
    %758 = vmatpush1.msra.mxu0 0.0
    %759 = vmatprep.subr.mxu0 0.0
    %760 = vmatpush1.msra.mxu0 0.0
    %761 = vmatprep.subr.mxu0 0.0
    %762 = vmatpush1.msra.mxu0 0.0
    %763 = vmatprep.subr.mxu0 0.0
    %764 = vmatpush1.msra.mxu0 0.0
    %765 = vmatprep.subr.mxu0 0.0
    %766 = vmatpush1.msra.mxu0 0.0
    %767 = vmatprep.subr.mxu0 0.0
    %768 = vmatpush1.msra.mxu0 0.0
    %769 = vmatprep.subr.mxu0 0.0
    %770 = vmatpush1.msra.mxu0 0.0
    %771 = vmatprep.subr.mxu0 0.0
    %772 = vmatpush1.msra.mxu0 0.0
    %773 = vmatprep.subr.mxu0 0.0
    %774 = vmatpush1.msra.mxu0 0.0
    %775 = vmatprep.subr.mxu0 0.0
    %776 = vmatpush1.msra.mxu0 0.0
    %777 = vmatprep.subr.mxu0 0.0
    %778 = vmatpush1.msra.mxu0 0.0
    %779 = vmatprep.subr.mxu0 0.0
    %780 = vmatpush1.msra.mxu0 0.0
    %781 = vmatprep.subr.mxu0 0.0
    %782 = vmatpush1.msra.mxu0 0.0
    %783 = vmatprep.subr.mxu0 0.0
    %784 = vmatpush1.msra.mxu0 0.0
    %785 = vmatprep.subr.mxu0 0.0
    %786 = vmatpush1.msra.mxu0 0.0
    %787 = vmatprep.subr.mxu0 0.0
    %788 = vmatpush1.msra.mxu0 0.0
    %789 = vmatprep.subr.mxu0 0.0
    %790 = vmatpush1.msra.mxu0 0.0
    %791 = vmatprep.mubr.f32.mxu0 0.0
    %v792 = vand.u32 %v547, 4294901760
    %v793 = vsub.f32 %v547, %v792
    %794 = vmatmul.mubr.f32.gmra.mrb[0].mxu0 %v793
    %v795 = vpop.f32.mrb[0].mxu0
    %v796 = vadd.f32 %v716, %v795
    %v797 = vpop.f32.mrb[0].mxu0
    %798 = vdwg.mxu0
    %799 = vmatprep.subr.mxu0 0.0
    %v800 = vand.u32 %v534, 4294901760
    %801 = vmatpush1.msra.mxu0 %v800
    %802 = vmatprep.subr.mxu0 0.0
    %v803 = vand.u32 %v535, 4294901760
    %804 = vmatpush1.msra.mxu0 %v803
    %805 = vmatprep.subr.mxu0 0.0
    %v806 = vand.u32 %v536, 4294901760
    %807 = vmatpush1.msra.mxu0 %v806
    %808 = vmatprep.subr.mxu0 0.0
    %v809 = vand.u32 %v537, 4294901760
    %810 = vmatpush1.msra.mxu0 %v809
    %811 = vmatprep.subr.mxu0 0.0
    %812 = vmatpush1.msra.mxu0 0.0
    %813 = vmatprep.subr.mxu0 0.0
    %814 = vmatpush1.msra.mxu0 0.0
    %815 = vmatprep.subr.mxu0 0.0
    %816 = vmatpush1.msra.mxu0 0.0
    %817 = vmatprep.subr.mxu0 0.0
    %818 = vmatpush1.msra.mxu0 0.0
    %819 = vmatprep.subr.mxu0 0.0
    %820 = vmatpush1.msra.mxu0 0.0
    %821 = vmatprep.subr.mxu0 0.0
    %822 = vmatpush1.msra.mxu0 0.0
    %823 = vmatprep.subr.mxu0 0.0
    %824 = vmatpush1.msra.mxu0 0.0
    %825 = vmatprep.subr.mxu0 0.0
    %826 = vmatpush1.msra.mxu0 0.0
    %827 = vmatprep.subr.mxu0 0.0
    %828 = vmatpush1.msra.mxu0 0.0
    %829 = vmatprep.subr.mxu0 0.0
    %830 = vmatpush1.msra.mxu0 0.0
    %831 = vmatprep.subr.mxu0 0.0
    %832 = vmatpush1.msra.mxu0 0.0
    %833 = vmatprep.subr.mxu0 0.0
    %834 = vmatpush1.msra.mxu0 0.0
    %835 = vmatprep.subr.mxu0 0.0
    %836 = vmatpush1.msra.mxu0 0.0
    %837 = vmatprep.subr.mxu0 0.0
    %838 = vmatpush1.msra.mxu0 0.0
    %839 = vmatprep.subr.mxu0 0.0
    %840 = vmatpush1.msra.mxu0 0.0
    %841 = vmatprep.subr.mxu0 0.0
    %842 = vmatpush1.msra.mxu0 0.0
    %843 = vmatprep.subr.mxu0 0.0
    %844 = vmatpush1.msra.mxu0 0.0
    %845 = vmatprep.subr.mxu0 0.0
    %846 = vmatpush1.msra.mxu0 0.0
    %847 = vmatprep.subr.mxu0 0.0
    %848 = vmatpush1.msra.mxu0 0.0
    %849 = vmatprep.subr.mxu0 0.0
    %850 = vmatpush1.msra.mxu0 0.0
    %851 = vmatprep.subr.mxu0 0.0
    %852 = vmatpush1.msra.mxu0 0.0
    %853 = vmatprep.subr.mxu0 0.0
    %854 = vmatpush1.msra.mxu0 0.0
    %855 = vmatprep.subr.mxu0 0.0
    %856 = vmatpush1.msra.mxu0 0.0
    %857 = vmatprep.subr.mxu0 0.0
    %858 = vmatpush1.msra.mxu0 0.0
    %859 = vmatprep.subr.mxu0 0.0
    %860 = vmatpush1.msra.mxu0 0.0
    %861 = vmatprep.subr.mxu0 0.0
    %862 = vmatpush1.msra.mxu0 0.0
    %863 = vmatprep.subr.mxu0 0.0
    %864 = vmatpush1.msra.mxu0 0.0
    %865 = vmatprep.subr.mxu0 0.0
    %866 = vmatpush1.msra.mxu0 0.0
    %867 = vmatprep.mubr.f32.mxu0 0.0
    %v868 = vand.u32 %v547, 4294901760
    %v869 = vsub.f32 %v547, %v868
    %v870 = vand.u32 %v869, 4294901760
    %871 = vmatmul.mubr.f32.gmra.mrb[0].mxu0 %v870
    %v872 = vpop.f32.mrb[0].mxu0
    %v873 = vadd.f32 %v796, %v872
    %v874 = vpop.f32.mrb[0].mxu0
    %875 = vdwg.mxu0
    %876 = vmatprep.subr.mxu0 0.0
    %v877 = vand.u32 %v534, 4294901760
    %v878 = vsub.f32 %v534, %v877
    %v879 = vand.u32 %v878, 4294901760
    %880 = vmatpush1.msra.mxu0 %v879
    %881 = vmatprep.subr.mxu0 0.0
    %v882 = vand.u32 %v535, 4294901760
    %v883 = vsub.f32 %v535, %v882
    %v884 = vand.u32 %v883, 4294901760
    %885 = vmatpush1.msra.mxu0 %v884
    %886 = vmatprep.subr.mxu0 0.0
    %v887 = vand.u32 %v536, 4294901760
    %v888 = vsub.f32 %v536, %v887
    %v889 = vand.u32 %v888, 4294901760
    %890 = vmatpush1.msra.mxu0 %v889
    %891 = vmatprep.subr.mxu0 0.0
    %v892 = vand.u32 %v537, 4294901760
    %v893 = vsub.f32 %v537, %v892
    %v894 = vand.u32 %v893, 4294901760
    %895 = vmatpush1.msra.mxu0 %v894
    %896 = vmatprep.subr.mxu0 0.0
    %897 = vmatpush1.msra.mxu0 0.0
    %898 = vmatprep.subr.mxu0 0.0
    %899 = vmatpush1.msra.mxu0 0.0
    %900 = vmatprep.subr.mxu0 0.0
    %901 = vmatpush1.msra.mxu0 0.0
    %902 = vmatprep.subr.mxu0 0.0
    %903 = vmatpush1.msra.mxu0 0.0
    %904 = vmatprep.subr.mxu0 0.0
    %905 = vmatpush1.msra.mxu0 0.0
    %906 = vmatprep.subr.mxu0 0.0
    %907 = vmatpush1.msra.mxu0 0.0
    %908 = vmatprep.subr.mxu0 0.0
    %909 = vmatpush1.msra.mxu0 0.0
    %910 = vmatprep.subr.mxu0 0.0
    %911 = vmatpush1.msra.mxu0 0.0
    %912 = vmatprep.subr.mxu0 0.0
    %913 = vmatpush1.msra.mxu0 0.0
    %914 = vmatprep.subr.mxu0 0.0
    %915 = vmatpush1.msra.mxu0 0.0
    %916 = vmatprep.subr.mxu0 0.0
    %917 = vmatpush1.msra.mxu0 0.0
    %918 = vmatprep.subr.mxu0 0.0
    %919 = vmatpush1.msra.mxu0 0.0
    %920 = vmatprep.subr.mxu0 0.0
    %921 = vmatpush1.msra.mxu0 0.0
    %922 = vmatprep.subr.mxu0 0.0
    %923 = vmatpush1.msra.mxu0 0.0
    %924 = vmatprep.subr.mxu0 0.0
    %925 = vmatpush1.msra.mxu0 0.0
    %926 = vmatprep.subr.mxu0 0.0
    %927 = vmatpush1.msra.mxu0 0.0
    %928 = vmatprep.subr.mxu0 0.0
    %929 = vmatpush1.msra.mxu0 0.0
    %930 = vmatprep.subr.mxu0 0.0
    %931 = vmatpush1.msra.mxu0 0.0
    %932 = vmatprep.subr.mxu0 0.0
    %933 = vmatpush1.msra.mxu0 0.0
    %934 = vmatprep.subr.mxu0 0.0
    %935 = vmatpush1.msra.mxu0 0.0
    %936 = vmatprep.subr.mxu0 0.0
    %937 = vmatpush1.msra.mxu0 0.0
    %938 = vmatprep.subr.mxu0 0.0
    %939 = vmatpush1.msra.mxu0 0.0
    %940 = vmatprep.subr.mxu0 0.0
    %941 = vmatpush1.msra.mxu0 0.0
    %942 = vmatprep.subr.mxu0 0.0
    %943 = vmatpush1.msra.mxu0 0.0
    %944 = vmatprep.subr.mxu0 0.0
    %945 = vmatpush1.msra.mxu0 0.0
    %946 = vmatprep.subr.mxu0 0.0
    %947 = vmatpush1.msra.mxu0 0.0
    %948 = vmatprep.subr.mxu0 0.0
    %949 = vmatpush1.msra.mxu0 0.0
    %950 = vmatprep.subr.mxu0 0.0
    %951 = vmatpush1.msra.mxu0 0.0
    %952 = vmatprep.mubr.f32.mxu0 0.0
    %v953 = vand.u32 %v547, 4294901760
    %954 = vmatmul.mubr.f32.gmra.mrb[0].mxu0 %v953
    %v955 = vpop.f32.mrb[0].mxu0
    %v956 = vadd.f32 %v873, %v955
    %v957 = vpop.f32.mrb[0].mxu0
    %958 = vdwg.mxu0
    %959 = vmatprep.subr.mxu0 0.0
    %v960 = vand.u32 %v534, 4294901760
    %961 = vmatpush1.msra.mxu0 %v960
    %962 = vmatprep.subr.mxu0 0.0
    %v963 = vand.u32 %v535, 4294901760
    %964 = vmatpush1.msra.mxu0 %v963
    %965 = vmatprep.subr.mxu0 0.0
    %v966 = vand.u32 %v536, 4294901760
    %967 = vmatpush1.msra.mxu0 %v966
    %968 = vmatprep.subr.mxu0 0.0
    %v969 = vand.u32 %v537, 4294901760
    %970 = vmatpush1.msra.mxu0 %v969
    %971 = vmatprep.subr.mxu0 0.0
    %972 = vmatpush1.msra.mxu0 0.0
    %973 = vmatprep.subr.mxu0 0.0
    %974 = vmatpush1.msra.mxu0 0.0
    %975 = vmatprep.subr.mxu0 0.0
    %976 = vmatpush1.msra.mxu0 0.0
    %977 = vmatprep.subr.mxu0 0.0
    %978 = vmatpush1.msra.mxu0 0.0
    %979 = vmatprep.subr.mxu0 0.0
    %980 = vmatpush1.msra.mxu0 0.0
    %981 = vmatprep.subr.mxu0 0.0
    %982 = vmatpush1.msra.mxu0 0.0
    %983 = vmatprep.subr.mxu0 0.0
    %984 = vmatpush1.msra.mxu0 0.0
    %985 = vmatprep.subr.mxu0 0.0
    %986 = vmatpush1.msra.mxu0 0.0
    %987 = vmatprep.subr.mxu0 0.0
    %988 = vmatpush1.msra.mxu0 0.0
    %989 = vmatprep.subr.mxu0 0.0
    %990 = vmatpush1.msra.mxu0 0.0
    %991 = vmatprep.subr.mxu0 0.0
    %992 = vmatpush1.msra.mxu0 0.0
    %993 = vmatprep.subr.mxu0 0.0
    %994 = vmatpush1.msra.mxu0 0.0
    %995 = vmatprep.subr.mxu0 0.0
    %996 = vmatpush1.msra.mxu0 0.0
    %997 = vmatprep.subr.mxu0 0.0
    %998 = vmatpush1.msra.mxu0 0.0
    %999 = vmatprep.subr.mxu0 0.0
    %1000 = vmatpush1.msra.mxu0 0.0
    %1001 = vmatprep.subr.mxu0 0.0
    %1002 = vmatpush1.msra.mxu0 0.0
    %1003 = vmatprep.subr.mxu0 0.0
    %1004 = vmatpush1.msra.mxu0 0.0
    %1005 = vmatprep.subr.mxu0 0.0
    %1006 = vmatpush1.msra.mxu0 0.0
    %1007 = vmatprep.subr.mxu0 0.0
    %1008 = vmatpush1.msra.mxu0 0.0
    %1009 = vmatprep.subr.mxu0 0.0
    %1010 = vmatpush1.msra.mxu0 0.0
    %1011 = vmatprep.subr.mxu0 0.0
    %1012 = vmatpush1.msra.mxu0 0.0
    %1013 = vmatprep.subr.mxu0 0.0
    %1014 = vmatpush1.msra.mxu0 0.0
    %1015 = vmatprep.subr.mxu0 0.0
    %1016 = vmatpush1.msra.mxu0 0.0
    %1017 = vmatprep.subr.mxu0 0.0
    %1018 = vmatpush1.msra.mxu0 0.0
    %1019 = vmatprep.subr.mxu0 0.0
    %1020 = vmatpush1.msra.mxu0 0.0
    %1021 = vmatprep.subr.mxu0 0.0
    %1022 = vmatpush1.msra.mxu0 0.0
    %1023 = vmatprep.subr.mxu0 0.0
    %1024 = vmatpush1.msra.mxu0 0.0
    %1025 = vmatprep.subr.mxu0 0.0
    %1026 = vmatpush1.msra.mxu0 0.0
    %1027 = vmatprep.mubr.f32.mxu0 0.0
    %v1028 = vand.u32 %v547, 4294901760
    %1029 = vmatmul.mubr.f32.gmra.mrb[0].mxu0 %v1028
    %v1030 = vpop.f32.mrb[0].mxu0
    %v1031 = vadd.f32 %v956, %v1030
    %v1032 = vpop.f32.mrb[0].mxu0
    %1033 = vdwg.mxu0
    %v1034 = vmul.f32 %v1031, 0.5
    %v1035 = vmul.f32 %v1031, 0.70710677
    %v1036 = verf.f32.pop %v1035
    %v1037 = vadd.f32 %v1036, 1.0
    %v1038 = vmul.f32 %v1034, %v1037
    %v1039 = vld [vmem:[%s7] sm:$0xff]
    %v1040 = vld [vmem:[%s7 + $0x8] sm:$0xff]
    %v1041 = vld [vmem:[%s7 + $0x10] sm:$0xff]
    %v1042 = vld [vmem:[%s7 + $0x18] sm:$0xff]
    %v1043 = vld [vmem:[%s8] sm:$0x1]
    %v1045 = vlaneseq
    %v1046 = vshrl.u32 %v1045, 7
    %v1047 = vsub.s32 0, %v1046
    %v1048 = vrot.slane %v1043, %v1047
    %v1051 = vsel %vm545, %v1038, 0
    %1053 = vmatprep.subr.mxu0 0.0
    %v1054 = vand.u32 %v1039, 4294901760
    %1055 = vmatpush1.msra.mxu0 %v1054
    %1056 = vmatprep.subr.mxu0 0.0
    %v1057 = vand.u32 %v1040, 4294901760
    %1058 = vmatpush1.msra.mxu0 %v1057
    %1059 = vmatprep.subr.mxu0 0.0
    %v1060 = vand.u32 %v1041, 4294901760
    %1061 = vmatpush1.msra.mxu0 %v1060
    %1062 = vmatprep.subr.mxu0 0.0
    %v1063 = vand.u32 %v1042, 4294901760
    %1064 = vmatpush1.msra.mxu0 %v1063
    %1065 = vmatprep.subr.mxu0 0.0
    %1066 = vmatpush1.msra.mxu0 0.0
    %1067 = vmatprep.subr.mxu0 0.0
    %1068 = vmatpush1.msra.mxu0 0.0
    %1069 = vmatprep.subr.mxu0 0.0
    %1070 = vmatpush1.msra.mxu0 0.0
    %1071 = vmatprep.subr.mxu0 0.0
    %1072 = vmatpush1.msra.mxu0 0.0
    %1073 = vmatprep.subr.mxu0 0.0
    %1074 = vmatpush1.msra.mxu0 0.0
    %1075 = vmatprep.subr.mxu0 0.0
    %1076 = vmatpush1.msra.mxu0 0.0
    %1077 = vmatprep.subr.mxu0 0.0
    %1078 = vmatpush1.msra.mxu0 0.0
    %1079 = vmatprep.subr.mxu0 0.0
    %1080 = vmatpush1.msra.mxu0 0.0
    %1081 = vmatprep.subr.mxu0 0.0
    %1082 = vmatpush1.msra.mxu0 0.0
    %1083 = vmatprep.subr.mxu0 0.0
    %1084 = vmatpush1.msra.mxu0 0.0
    %1085 = vmatprep.subr.mxu0 0.0
    %1086 = vmatpush1.msra.mxu0 0.0
    %1087 = vmatprep.subr.mxu0 0.0
    %1088 = vmatpush1.msra.mxu0 0.0
    %1089 = vmatprep.subr.mxu0 0.0
    %1090 = vmatpush1.msra.mxu0 0.0
    %1091 = vmatprep.subr.mxu0 0.0
    %1092 = vmatpush1.msra.mxu0 0.0
    %1093 = vmatprep.subr.mxu0 0.0
    %1094 = vmatpush1.msra.mxu0 0.0
    %1095 = vmatprep.subr.mxu0 0.0
    %1096 = vmatpush1.msra.mxu0 0.0
    %1097 = vmatprep.subr.mxu0 0.0
    %1098 = vmatpush1.msra.mxu0 0.0
    %1099 = vmatprep.subr.mxu0 0.0
    %1100 = vmatpush1.msra.mxu0 0.0
    %1101 = vmatprep.subr.mxu0 0.0
    %1102 = vmatpush1.msra.mxu0 0.0
    %1103 = vmatprep.subr.mxu0 0.0
    %1104 = vmatpush1.msra.mxu0 0.0
    %1105 = vmatprep.subr.mxu0 0.0
    %1106 = vmatpush1.msra.mxu0 0.0
    %1107 = vmatprep.subr.mxu0 0.0
    %1108 = vmatpush1.msra.mxu0 0.0
    %1109 = vmatprep.subr.mxu0 0.0
    %1110 = vmatpush1.msra.mxu0 0.0
    %1111 = vmatprep.subr.mxu0 0.0
    %1112 = vmatpush1.msra.mxu0 0.0
    %1113 = vmatprep.subr.mxu0 0.0
    %1114 = vmatpush1.msra.mxu0 0.0
    %1115 = vmatprep.subr.mxu0 0.0
    %1116 = vmatpush1.msra.mxu0 0.0
    %1117 = vmatprep.subr.mxu0 0.0
    %1118 = vmatpush1.msra.mxu0 0.0
    %1119 = vmatprep.subr.mxu0 0.0
    %1120 = vmatpush1.msra.mxu0 0.0
    %1121 = vmatprep.mubr.f32.mxu0 0.0
    %v1122 = vand.u32 %v1051, 4294901760
    %v1123 = vsub.f32 %v1051, %v1122
    %v1124 = vand.u32 %v1123, 4294901760
    %v1125 = vsub.f32 %v1123, %v1124
    %v1126 = vand.u32 %v1125, 4294901760
    %1127 = vmatmul.mubr.f32.gmra.mrb[0].mxu0 %v1126
    %v1128 = vpop.f32.mrb[0].mxu0
    %v1129 = vadd.f32 %v1048, %v1128
    %v1130 = vpop.f32.mrb[0].mxu0
    %1131 = vdwg.mxu0
    %1132 = vmatprep.subr.mxu0 0.0
    %v1133 = vand.u32 %v1039, 4294901760
    %v1134 = vsub.f32 %v1039, %v1133
    %v1135 = vand.u32 %v1134, 4294901760
    %v1136 = vsub.f32 %v1134, %v1135
    %v1137 = vand.u32 %v1136, 4294901760
    %1138 = vmatpush1.msra.mxu0 %v1137
    %1139 = vmatprep.subr.mxu0 0.0
    %v1140 = vand.u32 %v1040, 4294901760
    %v1141 = vsub.f32 %v1040, %v1140
    %v1142 = vand.u32 %v1141, 4294901760
    %v1143 = vsub.f32 %v1141, %v1142
    %v1144 = vand.u32 %v1143, 4294901760
    %1145 = vmatpush1.msra.mxu0 %v1144
    %1146 = vmatprep.subr.mxu0 0.0
    %v1147 = vand.u32 %v1041, 4294901760
    %v1148 = vsub.f32 %v1041, %v1147
    %v1149 = vand.u32 %v1148, 4294901760
    %v1150 = vsub.f32 %v1148, %v1149
    %v1151 = vand.u32 %v1150, 4294901760
    %1152 = vmatpush1.msra.mxu0 %v1151
    %1153 = vmatprep.subr.mxu0 0.0
    %v1154 = vand.u32 %v1042, 4294901760
    %v1155 = vsub.f32 %v1042, %v1154
    %v1156 = vand.u32 %v1155, 4294901760
    %v1157 = vsub.f32 %v1155, %v1156
    %v1158 = vand.u32 %v1157, 4294901760
    %1159 = vmatpush1.msra.mxu0 %v1158
    %1160 = vmatprep.subr.mxu0 0.0
    %1161 = vmatpush1.msra.mxu0 0.0
    %1162 = vmatprep.subr.mxu0 0.0
    %1163 = vmatpush1.msra.mxu0 0.0
    %1164 = vmatprep.subr.mxu0 0.0
    %1165 = vmatpush1.msra.mxu0 0.0
    %1166 = vmatprep.subr.mxu0 0.0
    %1167 = vmatpush1.msra.mxu0 0.0
    %1168 = vmatprep.subr.mxu0 0.0
    %1169 = vmatpush1.msra.mxu0 0.0
    %1170 = vmatprep.subr.mxu0 0.0
    %1171 = vmatpush1.msra.mxu0 0.0
    %1172 = vmatprep.subr.mxu0 0.0
    %1173 = vmatpush1.msra.mxu0 0.0
    %1174 = vmatprep.subr.mxu0 0.0
    %1175 = vmatpush1.msra.mxu0 0.0
    %1176 = vmatprep.subr.mxu0 0.0
    %1177 = vmatpush1.msra.mxu0 0.0
    %1178 = vmatprep.subr.mxu0 0.0
    %1179 = vmatpush1.msra.mxu0 0.0
    %1180 = vmatprep.subr.mxu0 0.0
    %1181 = vmatpush1.msra.mxu0 0.0
    %1182 = vmatprep.subr.mxu0 0.0
    %1183 = vmatpush1.msra.mxu0 0.0
    %1184 = vmatprep.subr.mxu0 0.0
    %1185 = vmatpush1.msra.mxu0 0.0
    %1186 = vmatprep.subr.mxu0 0.0
    %1187 = vmatpush1.msra.mxu0 0.0
    %1188 = vmatprep.subr.mxu0 0.0
    %1189 = vmatpush1.msra.mxu0 0.0
    %1190 = vmatprep.subr.mxu0 0.0
    %1191 = vmatpush1.msra.mxu0 0.0
    %1192 = vmatprep.subr.mxu0 0.0
    %1193 = vmatpush1.msra.mxu0 0.0
    %1194 = vmatprep.subr.mxu0 0.0
    %1195 = vmatpush1.msra.mxu0 0.0
    %1196 = vmatprep.subr.mxu0 0.0
    %1197 = vmatpush1.msra.mxu0 0.0
    %1198 = vmatprep.subr.mxu0 0.0
    %1199 = vmatpush1.msra.mxu0 0.0
    %1200 = vmatprep.subr.mxu0 0.0
    %1201 = vmatpush1.msra.mxu0 0.0
    %1202 = vmatprep.subr.mxu0 0.0
    %1203 = vmatpush1.msra.mxu0 0.0
    %1204 = vmatprep.subr.mxu0 0.0
    %1205 = vmatpush1.msra.mxu0 0.0
    %1206 = vmatprep.subr.mxu0 0.0
    %1207 = vmatpush1.msra.mxu0 0.0
    %1208 = vmatprep.subr.mxu0 0.0
    %1209 = vmatpush1.msra.mxu0 0.0
    %1210 = vmatprep.subr.mxu0 0.0
    %1211 = vmatpush1.msra.mxu0 0.0
    %1212 = vmatprep.subr.mxu0 0.0
    %1213 = vmatpush1.msra.mxu0 0.0
    %1214 = vmatprep.subr.mxu0 0.0
    %1215 = vmatpush1.msra.mxu0 0.0
    %1216 = vmatprep.mubr.f32.mxu0 0.0
    %v1217 = vand.u32 %v1051, 4294901760
    %1218 = vmatmul.mubr.f32.gmra.mrb[0].mxu0 %v1217
    %v1219 = vpop.f32.mrb[0].mxu0
    %v1220 = vadd.f32 %v1129, %v1219
    %v1221 = vpop.f32.mrb[0].mxu0
    %1222 = vdwg.mxu0
    %1223 = vmatprep.subr.mxu0 0.0
    %v1224 = vand.u32 %v1039, 4294901760
    %v1225 = vsub.f32 %v1039, %v1224
    %1226 = vmatpush1.msra.mxu0 %v1225
    %1227 = vmatprep.subr.mxu0 0.0
    %v1228 = vand.u32 %v1040, 4294901760
    %v1229 = vsub.f32 %v1040, %v1228
    %1230 = vmatpush1.msra.mxu0 %v1229
    %1231 = vmatprep.subr.mxu0 0.0
    %v1232 = vand.u32 %v1041, 4294901760
    %v1233 = vsub.f32 %v1041, %v1232
    %1234 = vmatpush1.msra.mxu0 %v1233
    %1235 = vmatprep.subr.mxu0 0.0
    %v1236 = vand.u32 %v1042, 4294901760
    %v1237 = vsub.f32 %v1042, %v1236
    %1238 = vmatpush1.msra.mxu0 %v1237
    %1239 = vmatprep.subr.mxu0 0.0
    %1240 = vmatpush1.msra.mxu0 0.0
    %1241 = vmatprep.subr.mxu0 0.0
    %1242 = vmatpush1.msra.mxu0 0.0
    %1243 = vmatprep.subr.mxu0 0.0
    %1244 = vmatpush1.msra.mxu0 0.0
    %1245 = vmatprep.subr.mxu0 0.0
    %1246 = vmatpush1.msra.mxu0 0.0
    %1247 = vmatprep.subr.mxu0 0.0
    %1248 = vmatpush1.msra.mxu0 0.0
    %1249 = vmatprep.subr.mxu0 0.0
    %1250 = vmatpush1.msra.mxu0 0.0
    %1251 = vmatprep.subr.mxu0 0.0
    %1252 = vmatpush1.msra.mxu0 0.0
    %1253 = vmatprep.subr.mxu0 0.0
    %1254 = vmatpush1.msra.mxu0 0.0
    %1255 = vmatprep.subr.mxu0 0.0
    %1256 = vmatpush1.msra.mxu0 0.0
    %1257 = vmatprep.subr.mxu0 0.0
    %1258 = vmatpush1.msra.mxu0 0.0
    %1259 = vmatprep.subr.mxu0 0.0
    %1260 = vmatpush1.msra.mxu0 0.0
    %1261 = vmatprep.subr.mxu0 0.0
    %1262 = vmatpush1.msra.mxu0 0.0
    %1263 = vmatprep.subr.mxu0 0.0
    %1264 = vmatpush1.msra.mxu0 0.0
    %1265 = vmatprep.subr.mxu0 0.0
    %1266 = vmatpush1.msra.mxu0 0.0
    %1267 = vmatprep.subr.mxu0 0.0
    %1268 = vmatpush1.msra.mxu0 0.0
    %1269 = vmatprep.subr.mxu0 0.0
    %1270 = vmatpush1.msra.mxu0 0.0
    %1271 = vmatprep.subr.mxu0 0.0
    %1272 = vmatpush1.msra.mxu0 0.0
    %1273 = vmatprep.subr.mxu0 0.0
    %1274 = vmatpush1.msra.mxu0 0.0
    %1275 = vmatprep.subr.mxu0 0.0
    %1276 = vmatpush1.msra.mxu0 0.0
    %1277 = vmatprep.subr.mxu0 0.0
    %1278 = vmatpush1.msra.mxu0 0.0
    %1279 = vmatprep.subr.mxu0 0.0
    %1280 = vmatpush1.msra.mxu0 0.0
    %1281 = vmatprep.subr.mxu0 0.0
    %1282 = vmatpush1.msra.mxu0 0.0
    %1283 = vmatprep.subr.mxu0 0.0
    %1284 = vmatpush1.msra.mxu0 0.0
    %1285 = vmatprep.subr.mxu0 0.0
    %1286 = vmatpush1.msra.mxu0 0.0
    %1287 = vmatprep.subr.mxu0 0.0
    %1288 = vmatpush1.msra.mxu0 0.0
    %1289 = vmatprep.subr.mxu0 0.0
    %1290 = vmatpush1.msra.mxu0 0.0
    %1291 = vmatprep.subr.mxu0 0.0
    %1292 = vmatpush1.msra.mxu0 0.0
    %1293 = vmatprep.subr.mxu0 0.0
    %1294 = vmatpush1.msra.mxu0 0.0
    %1295 = vmatprep.mubr.f32.mxu0 0.0
    %v1296 = vand.u32 %v1051, 4294901760
    %v1297 = vsub.f32 %v1051, %v1296
    %1298 = vmatmul.mubr.f32.gmra.mrb[0].mxu0 %v1297
    %v1299 = vpop.f32.mrb[0].mxu0
    %v1300 = vadd.f32 %v1220, %v1299
    %v1301 = vpop.f32.mrb[0].mxu0
    %1302 = vdwg.mxu0
    %1303 = vmatprep.subr.mxu0 0.0
    %v1304 = vand.u32 %v1039, 4294901760
    %1305 = vmatpush1.msra.mxu0 %v1304
    %1306 = vmatprep.subr.mxu0 0.0
    %v1307 = vand.u32 %v1040, 4294901760
    %1308 = vmatpush1.msra.mxu0 %v1307
    %1309 = vmatprep.subr.mxu0 0.0
    %v1310 = vand.u32 %v1041, 4294901760
    %1311 = vmatpush1.msra.mxu0 %v1310
    %1312 = vmatprep.subr.mxu0 0.0
    %v1313 = vand.u32 %v1042, 4294901760
    %1314 = vmatpush1.msra.mxu0 %v1313
    %1315 = vmatprep.subr.mxu0 0.0
    %1316 = vmatpush1.msra.mxu0 0.0
    %1317 = vmatprep.subr.mxu0 0.0
    %1318 = vmatpush1.msra.mxu0 0.0
    %1319 = vmatprep.subr.mxu0 0.0
    %1320 = vmatpush1.msra.mxu0 0.0
    %1321 = vmatprep.subr.mxu0 0.0
    %1322 = vmatpush1.msra.mxu0 0.0
    %1323 = vmatprep.subr.mxu0 0.0
    %1324 = vmatpush1.msra.mxu0 0.0
    %1325 = vmatprep.subr.mxu0 0.0
    %1326 = vmatpush1.msra.mxu0 0.0
    %1327 = vmatprep.subr.mxu0 0.0
    %1328 = vmatpush1.msra.mxu0 0.0
    %1329 = vmatprep.subr.mxu0 0.0
    %1330 = vmatpush1.msra.mxu0 0.0
    %1331 = vmatprep.subr.mxu0 0.0
    %1332 = vmatpush1.msra.mxu0 0.0
    %1333 = vmatprep.subr.mxu0 0.0
    %1334 = vmatpush1.msra.mxu0 0.0
    %1335 = vmatprep.subr.mxu0 0.0
    %1336 = vmatpush1.msra.mxu0 0.0
    %1337 = vmatprep.subr.mxu0 0.0
    %1338 = vmatpush1.msra.mxu0 0.0
    %1339 = vmatprep.subr.mxu0 0.0
    %1340 = vmatpush1.msra.mxu0 0.0
    %1341 = vmatprep.subr.mxu0 0.0
    %1342 = vmatpush1.msra.mxu0 0.0
    %1343 = vmatprep.subr.mxu0 0.0
    %1344 = vmatpush1.msra.mxu0 0.0
    %1345 = vmatprep.subr.mxu0 0.0
    %1346 = vmatpush1.msra.mxu0 0.0
    %1347 = vmatprep.subr.mxu0 0.0
    %1348 = vmatpush1.msra.mxu0 0.0
    %1349 = vmatprep.subr.mxu0 0.0
    %1350 = vmatpush1.msra.mxu0 0.0
    %1351 = vmatprep.subr.mxu0 0.0
    %1352 = vmatpush1.msra.mxu0 0.0
    %1353 = vmatprep.subr.mxu0 0.0
    %1354 = vmatpush1.msra.mxu0 0.0
    %1355 = vmatprep.subr.mxu0 0.0
    %1356 = vmatpush1.msra.mxu0 0.0
    %1357 = vmatprep.subr.mxu0 0.0
    %1358 = vmatpush1.msra.mxu0 0.0
    %1359 = vmatprep.subr.mxu0 0.0
    %1360 = vmatpush1.msra.mxu0 0.0
    %1361 = vmatprep.subr.mxu0 0.0
    %1362 = vmatpush1.msra.mxu0 0.0
    %1363 = vmatprep.subr.mxu0 0.0
    %1364 = vmatpush1.msra.mxu0 0.0
    %1365 = vmatprep.subr.mxu0 0.0
    %1366 = vmatpush1.msra.mxu0 0.0
    %1367 = vmatprep.subr.mxu0 0.0
    %1368 = vmatpush1.msra.mxu0 0.0
    %1369 = vmatprep.subr.mxu0 0.0
    %1370 = vmatpush1.msra.mxu0 0.0
    %1371 = vmatprep.mubr.f32.mxu0 0.0
    %v1372 = vand.u32 %v1051, 4294901760
    %v1373 = vsub.f32 %v1051, %v1372
    %v1374 = vand.u32 %v1373, 4294901760
    %1375 = vmatmul.mubr.f32.gmra.mrb[0].mxu0 %v1374
    %v1376 = vpop.f32.mrb[0].mxu0
    %v1377 = vadd.f32 %v1300, %v1376
    %v1378 = vpop.f32.mrb[0].mxu0
    %1379 = vdwg.mxu0
    %1380 = vmatprep.subr.mxu0 0.0
    %v1381 = vand.u32 %v1039, 4294901760
    %v1382 = vsub.f32 %v1039, %v1381
    %v1383 = vand.u32 %v1382, 4294901760
    %1384 = vmatpush1.msra.mxu0 %v1383
    %1385 = vmatprep.subr.mxu0 0.0
    %v1386 = vand.u32 %v1040, 4294901760
    %v1387 = vsub.f32 %v1040, %v1386
    %v1388 = vand.u32 %v1387, 4294901760
    %1389 = vmatpush1.msra.mxu0 %v1388
    %1390 = vmatprep.subr.mxu0 0.0
    %v1391 = vand.u32 %v1041, 4294901760
    %v1392 = vsub.f32 %v1041, %v1391
    %v1393 = vand.u32 %v1392, 4294901760
    %1394 = vmatpush1.msra.mxu0 %v1393
    %1395 = vmatprep.subr.mxu0 0.0
    %v1396 = vand.u32 %v1042, 4294901760
    %v1397 = vsub.f32 %v1042, %v1396
    %v1398 = vand.u32 %v1397, 4294901760
    %1399 = vmatpush1.msra.mxu0 %v1398
    %1400 = vmatprep.subr.mxu0 0.0
    %1401 = vmatpush1.msra.mxu0 0.0
    %1402 = vmatprep.subr.mxu0 0.0
    %1403 = vmatpush1.msra.mxu0 0.0
    %1404 = vmatprep.subr.mxu0 0.0
    %1405 = vmatpush1.msra.mxu0 0.0
    %1406 = vmatprep.subr.mxu0 0.0
    %1407 = vmatpush1.msra.mxu0 0.0
    %1408 = vmatprep.subr.mxu0 0.0
    %1409 = vmatpush1.msra.mxu0 0.0
    %1410 = vmatprep.subr.mxu0 0.0
    %1411 = vmatpush1.msra.mxu0 0.0
    %1412 = vmatprep.subr.mxu0 0.0
    %1413 = vmatpush1.msra.mxu0 0.0
    %1414 = vmatprep.subr.mxu0 0.0
    %1415 = vmatpush1.msra.mxu0 0.0
    %1416 = vmatprep.subr.mxu0 0.0
    %1417 = vmatpush1.msra.mxu0 0.0
    %1418 = vmatprep.subr.mxu0 0.0
    %1419 = vmatpush1.msra.mxu0 0.0
    %1420 = vmatprep.subr.mxu0 0.0
    %1421 = vmatpush1.msra.mxu0 0.0
    %1422 = vmatprep.subr.mxu0 0.0
    %1423 = vmatpush1.msra.mxu0 0.0
    %1424 = vmatprep.subr.mxu0 0.0
    %1425 = vmatpush1.msra.mxu0 0.0
    %1426 = vmatprep.subr.mxu0 0.0
    %1427 = vmatpush1.msra.mxu0 0.0
    %1428 = vmatprep.subr.mxu0 0.0
    %1429 = vmatpush1.msra.mxu0 0.0
    %1430 = vmatprep.subr.mxu0 0.0
    %1431 = vmatpush1.msra.mxu0 0.0
    %1432 = vmatprep.subr.mxu0 0.0
    %1433 = vmatpush1.msra.mxu0 0.0
    %1434 = vmatprep.subr.mxu0 0.0
    %1435 = vmatpush1.msra.mxu0 0.0
    %1436 = vmatprep.subr.mxu0 0.0
    %1437 = vmatpush1.msra.mxu0 0.0
    %1438 = vmatprep.subr.mxu0 0.0
    %1439 = vmatpush1.msra.mxu0 0.0
    %1440 = vmatprep.subr.mxu0 0.0
    %1441 = vmatpush1.msra.mxu0 0.0
    %1442 = vmatprep.subr.mxu0 0.0
    %1443 = vmatpush1.msra.mxu0 0.0
    %1444 = vmatprep.subr.mxu0 0.0
    %1445 = vmatpush1.msra.mxu0 0.0
    %1446 = vmatprep.subr.mxu0 0.0
    %1447 = vmatpush1.msra.mxu0 0.0
    %1448 = vmatprep.subr.mxu0 0.0
    %1449 = vmatpush1.msra.mxu0 0.0
    %1450 = vmatprep.subr.mxu0 0.0
    %1451 = vmatpush1.msra.mxu0 0.0
    %1452 = vmatprep.subr.mxu0 0.0
    %1453 = vmatpush1.msra.mxu0 0.0
    %1454 = vmatprep.subr.mxu0 0.0
    %1455 = vmatpush1.msra.mxu0 0.0
    %1456 = vmatprep.mubr.f32.mxu0 0.0
    %v1457 = vand.u32 %v1051, 4294901760
    %1458 = vmatmul.mubr.f32.gmra.mrb[0].mxu0 %v1457
    %v1459 = vpop.f32.mrb[0].mxu0
    %v1460 = vadd.f32 %v1377, %v1459
    %v1461 = vpop.f32.mrb[0].mxu0
    %1462 = vdwg.mxu0
    %1463 = vmatprep.subr.mxu0 0.0
    %v1464 = vand.u32 %v1039, 4294901760
    %1465 = vmatpush1.msra.mxu0 %v1464
    %1466 = vmatprep.subr.mxu0 0.0
    %v1467 = vand.u32 %v1040, 4294901760
    %1468 = vmatpush1.msra.mxu0 %v1467
    %1469 = vmatprep.subr.mxu0 0.0
    %v1470 = vand.u32 %v1041, 4294901760
    %1471 = vmatpush1.msra.mxu0 %v1470
    %1472 = vmatprep.subr.mxu0 0.0
    %v1473 = vand.u32 %v1042, 4294901760
    %1474 = vmatpush1.msra.mxu0 %v1473
    %1475 = vmatprep.subr.mxu0 0.0
    %1476 = vmatpush1.msra.mxu0 0.0
    %1477 = vmatprep.subr.mxu0 0.0
    %1478 = vmatpush1.msra.mxu0 0.0
    %1479 = vmatprep.subr.mxu0 0.0
    %1480 = vmatpush1.msra.mxu0 0.0
    %1481 = vmatprep.subr.mxu0 0.0
    %1482 = vmatpush1.msra.mxu0 0.0
    %1483 = vmatprep.subr.mxu0 0.0
    %1484 = vmatpush1.msra.mxu0 0.0
    %1485 = vmatprep.subr.mxu0 0.0
    %1486 = vmatpush1.msra.mxu0 0.0
    %1487 = vmatprep.subr.mxu0 0.0
    %1488 = vmatpush1.msra.mxu0 0.0
    %1489 = vmatprep.subr.mxu0 0.0
    %1490 = vmatpush1.msra.mxu0 0.0
    %1491 = vmatprep.subr.mxu0 0.0
    %1492 = vmatpush1.msra.mxu0 0.0
    %1493 = vmatprep.subr.mxu0 0.0
    %1494 = vmatpush1.msra.mxu0 0.0
    %1495 = vmatprep.subr.mxu0 0.0
    %1496 = vmatpush1.msra.mxu0 0.0
    %1497 = vmatprep.subr.mxu0 0.0
    %1498 = vmatpush1.msra.mxu0 0.0
    %1499 = vmatprep.subr.mxu0 0.0
    %1500 = vmatpush1.msra.mxu0 0.0
    %1501 = vmatprep.subr.mxu0 0.0
    %1502 = vmatpush1.msra.mxu0 0.0
    %1503 = vmatprep.subr.mxu0 0.0
    %1504 = vmatpush1.msra.mxu0 0.0
    %1505 = vmatprep.subr.mxu0 0.0
    %1506 = vmatpush1.msra.mxu0 0.0
    %1507 = vmatprep.subr.mxu0 0.0
    %1508 = vmatpush1.msra.mxu0 0.0
    %1509 = vmatprep.subr.mxu0 0.0
    %1510 = vmatpush1.msra.mxu0 0.0
    %1511 = vmatprep.subr.mxu0 0.0
    %1512 = vmatpush1.msra.mxu0 0.0
    %1513 = vmatprep.subr.mxu0 0.0
    %1514 = vmatpush1.msra.mxu0 0.0
    %1515 = vmatprep.subr.mxu0 0.0
    %1516 = vmatpush1.msra.mxu0 0.0
    %1517 = vmatprep.subr.mxu0 0.0
    %1518 = vmatpush1.msra.mxu0 0.0
    %1519 = vmatprep.subr.mxu0 0.0
    %1520 = vmatpush1.msra.mxu0 0.0
    %1521 = vmatprep.subr.mxu0 0.0
    %1522 = vmatpush1.msra.mxu0 0.0
    %1523 = vmatprep.subr.mxu0 0.0
    %1524 = vmatpush1.msra.mxu0 0.0
    %1525 = vmatprep.subr.mxu0 0.0
    %1526 = vmatpush1.msra.mxu0 0.0
    %1527 = vmatprep.subr.mxu0 0.0
    %1528 = vmatpush1.msra.mxu0 0.0
    %1529 = vmatprep.subr.mxu0 0.0
    %1530 = vmatpush1.msra.mxu0 0.0
    %1531 = vmatprep.mubr.f32.mxu0 0.0
    %v1532 = vand.u32 %v1051, 4294901760
    %1533 = vmatmul.mubr.f32.gmra.mrb[0].mxu0 %v1532
    %v1534 = vpop.f32.mrb[0].mxu0
    %v1535 = vadd.f32 %v1460, %v1534
    %v1536 = vpop.f32.mrb[0].mxu0
    %1537 = vdwg.mxu0
    %1538 = vst.msk [vmem:[#allocation2] sm:$0xff] %vm48, %v1535
    // Predicated region
    $region38: #{denoiser_forward.1} parent=1 // pred_check
      _
    $region39: #{denoiser_forward.1} parent=1 // pred_check_branch
      %1540 = sbr.rel (0) target = $region41
    $region40: #{denoiser_forward.1} parent=1 // pred_region
      %s1542 = ssub.s32 128, 128
      %1543 = vsyncadd [#allocation3], %s1542
      %s1545 = sshll.u32 [#allocation2], 4
      %s1546 = int_to_ptr.vmem [resolvable:$true] %s1545
      %1548 = dma.vmem_to_hbm [thread:$0]  %s1546, 128, %s9, [#allocation3]
    $region41: #{denoiser_forward.1} parent=1 // pred_fallthru
      _
    // Predicated region
    $region42: #{denoiser_forward.1} parent=1 // pred_check
      _
    $region43: #{denoiser_forward.1} parent=1 // pred_check_branch
      %1550 = sbr.rel (0) target = $region45
    $region44: #{denoiser_forward.1} parent=1 // pred_region
      %1551 = dma.done [#allocation3], 128
    $region45: #{denoiser_forward.1} parent=1 // pred_fallthru
      _
    %1552 = vsyncpa [#allocation3], 1

</llo_original>
